<compile_context>
chip_gen: v5e
topology: v5e:2x2
jax: 0.10.0
libtpu: 0.0.40
codegen_flags: <defaults>
</compile_context>

<pallas_src>
import math
import functools

import jax
import jax.numpy as jnp
from jax.experimental import pallas as pl
from jax.experimental.pallas import tpu as pltpu


def _round_up(x, m):
    return (x + m - 1) // m * m


# ---------------------------------------------------------------------------
# Kernel
# ---------------------------------------------------------------------------
def latent_diff_kernel(
    idx_ref,      # [tn, 8]          int32: mask, res_idx, chain_idx, entity_idx, batch_idx, 0,0,0
    xc_ref,       # [tn, C_xc]       bf16  concat(latent_rep, condition_embed)
    w_in_ref,     # [T_pad + C_xc,D] bf16  [pos|chain|entity|batch_cond table ; w_in ; w_ctx]
    b_in_ref,     # [1, D]           f32
    w_h_ref,      # [D, D]           bf16
    b_h_ref,      # [1, D]           f32
    w_out_ref,    # [D, CP]          bf16  (cols >= C_in are zero)
    b_out_ref,    # [1, CP]          f32
    w_epi_ref,    # [CP, K_pad + CP] bf16  [-2*codebook^T | nll head shifted to lanes C_in..C_in+A]
    b_epi_ref,    # [1, K_pad + CP]  f32   [||codebook||^2 | nll bias shifted]
    out_ref,      # [tn, CP]         f32 out: pred in lanes [0,C_in), logits in [C_in, C_in+A)
    l2_ref,       # [tn, K_pad]      f32 out
    *, off_chain, off_ent, off_batch, pad_num, pad_chain_num, pad_entity_num):
    C_xc = xc_ref.shape[1]
    T = w_in_ref.shape[0] - C_xc          # multiple of 128 (padded in wrapper)
    K_pad = l2_ref.shape[1]

    mask_i = idx_ref[:, 0:1]              # [n, 1] int32
    is_pad = mask_i == 0                  # padding_mask = ~single_mask
    mask = (mask_i != 0).astype(jnp.float32)

    # (1, T) iota broadcast against [n, 1] indices -> no [n, T] int32 temp.
    iota = jax.lax.broadcasted_iota(jnp.int32, (1, T), 1)

    def seg_hot(col, offset, pad_value):
        idx = idx_ref[:, col:col + 1]
        if pad_value is not None:         # idx*~pad + pad_value*pad
            idx = jnp.where(is_pad, jnp.int32(pad_value), idx)
        return iota == (idx + offset)

    # Fused multi-hot == pos_emb + chain_emb + entity_emb + (timestep+state)
    # for this token, realized together with the x/ctx projection in ONE MXU
    # matmul below.
    # TODO(synk): out-of-range indices give an all-zero one-hot row (silently
    # skip that embedding) instead of raising like nn.Embedding.
    multi_hot = (seg_hot(1, 0, pad_num)
                 | seg_hot(2, off_chain, pad_chain_num)
                 | seg_hot(3, off_ent, pad_entity_num)
                 | seg_hot(4, off_batch, None))

    # ---- self.ldm(None, t, y, single_mask, input_hidden, single_condition, condition_embed)
    # TODO(synk): the DiT/UViT/ESM2 encoder is external to this module; replaced
    # with a representative conditioned 2-layer MLP on identical interfaces.
    lhs = jnp.concatenate([multi_hot.astype(jnp.bfloat16), xc_ref[...]], axis=-1)
    h = jnp.dot(lhs, w_in_ref[...], preferred_element_type=jnp.float32) + b_in_ref[...]
    h = jax.nn.gelu(h, approximate=True)                                # f32 math
    h = jax.nn.gelu(
        jnp.dot(h.astype(jnp.bfloat16), w_h_ref[...],
                preferred_element_type=jnp.float32) + b_h_ref[...],
        approximate=True)
    pred = (jnp.dot(h.astype(jnp.bfloat16), w_out_ref[...],
                    preferred_element_type=jnp.float32) + b_out_ref[...]) * mask

    # ---- fused epilogue: [l2 cross term | aatype logits] in ONE MXU matmul.
    epi = (jnp.dot(pred.astype(jnp.bfloat16), w_epi_ref[...],
                   preferred_element_type=jnp.float32) + b_epi_ref[...])

    # l2_distance = ||p||^2 + ||c||^2 - 2 p.c ; clamp at 0 (bf16 cross term).
    p_norm = jnp.sum(pred * pred, axis=-1, keepdims=True)               # f32
    l2_ref[...] = jnp.maximum(p_norm + epi[:, :K_pad], 0.0)

    # pred occupies lanes [0, C_in); logits occupy lanes [C_in, C_in+A); the
    # two are disjoint by construction so one add packs both into a single
    # lane-dense f32 output stream.
    out_ref[...] = pred + epi[:, K_pad:]


# ---------------------------------------------------------------------------
# Parameter construction / packing
# ---------------------------------------------------------------------------
def sinusoidal_table(rows, dim):
    pos = jnp.arange(rows, dtype=jnp.float32)[:, None]
    half = jnp.arange(0, dim, 2, dtype=jnp.float32)
    div = jnp.exp(-math.log(10000.0) * half / dim)
    ang = pos * div[None, :]
    tab = jnp.zeros((rows, dim), jnp.float32)
    tab = tab.at[:, 0::2].set(jnp.sin(ang))
    tab = tab.at[:, 1::2].set(jnp.cos(ang))
    return tab


def timestep_embedding(t, dim):
    half = dim // 2
    freqs = jnp.exp(-math.log(10000.0) * jnp.arange(half, dtype=jnp.float32) / half)
    args = t.astype(jnp.float32)[:, None] * freqs[None, :]
    return jnp.concatenate([jnp.cos(args), jnp.sin(args)], axis=-1)


def make_params(key, *, in_channels, embed_dim, ctx_channels, max_seq_len,
                max_chain_len, max_entity_len, num_states, num_codes, num_aatype):
    ks = jax.random.split(key, 10)

    def nrm(k, shape, scale=0.02):
        return (scale * jax.random.normal(k, shape)).astype(jnp.float32)

    return dict(
        pos_tab=sinusoidal_table(max_seq_len, embed_dim),      # TransformerPositionEncoding
        chain_tab=nrm(ks[0], (max_chain_len, embed_dim)),      # nn.Embedding
        ent_tab=nrm(ks[1], (max_entity_len, embed_dim)),       # nn.Embedding
        y_tab=nrm(ks[2], (num_states, embed_dim)),
        w_in=nrm(ks[3], (in_channels, embed_dim)),
        b_in=jnp.zeros((1, embed_dim), jnp.float32),
        w_ctx=nrm(ks[4], (ctx_channels, embed_dim)),
        w_h=nrm(ks[5], (embed_dim, embed_dim)),
        b_h=jnp.zeros((1, embed_dim), jnp.float32),
        w_out=nrm(ks[6], (embed_dim, in_channels)),
        b_out=jnp.zeros((1, in_channels), jnp.float32),
        codebook=nrm(ks[7], (num_codes, in_channels), scale=1.0),  # ldm.x_embedder.wtb.weight
        w_nll=nrm(ks[8], (in_channels, num_aatype)),               # ldm.nll_head
        b_nll=jnp.zeros((1, num_aatype), jnp.float32),
    )


def pack_weights(params):
    """One-time repack: fuse projections, pad/shift so pred+logits share one
    128-lane-dense output block, fuse codebook + nll head into one epilogue
    matrix, cast all matmul operands to bf16.

    NOTE(perf): with embed_dim=32 every matmul K/N dim is far below the MXU
    width (128 on v5e, 256 on v6e/v7x); if embed_dim is a free config knob,
    size it to a multiple of 128/256 — otherwise the kernel stays DMA/VPU
    bound and bandwidth (not MXU) is the lever, which is what this packing
    optimizes for.
    """
    D = params['w_h'].shape[0]
    C_in = params['w_out'].shape[1]
    K = params['codebook'].shape[0]
    A = params['w_nll'].shape[1]
    CP = _round_up(C_in + A, 128)      # combined pred+logits lane block
    K_pad = _round_up(K, 128)

    bf = lambda a: a.astype(jnp.bfloat16)

    # input projection (concatenated at runtime with the conditioning table)
    w_xc = jnp.concatenate([params['w_in'], params['w_ctx']], axis=0)

    # output projection: pred occupies lanes [0, C_in), rest zero.
    w_out = jnp.zeros((D, CP), jnp.float32).at[:, :C_in].set(params['w_out'])
    b_out = jnp.zeros((1, CP), jnp.float32).at[:, :C_in].set(params['b_out'])

    # fused epilogue:  [ -2 * codebook^T  |  nll head shifted to lanes C_in.. )
    cb_pad = jnp.zeros((K_pad, CP), jnp.float32).at[:K, :C_in].set(params['codebook'])
    cb_norm = jnp.sum(cb_pad * cb_pad, axis=-1)[None, :]                 # [1, K_pad] exact f32
    w_nll_sh = jnp.zeros((CP, CP), jnp.float32).at[:C_in, C_in:C_in + A].set(params['w_nll'])
    b_nll_sh = jnp.zeros((1, CP), jnp.float32).at[:, C_in:C_in + A].set(params['b_nll'])
    w_epi = jnp.concatenate([-2.0 * cb_pad.T, w_nll_sh], axis=1)         # [CP, K_pad+CP]
    b_epi = jnp.concatenate([cb_norm, b_nll_sh], axis=1)                 # [1,  K_pad+CP]

    return dict(
        pos_tab=params['pos_tab'], chain_tab=params['chain_tab'],
        ent_tab=params['ent_tab'], y_tab=params['y_tab'],
        w_xc=bf(w_xc), b_in=params['b_in'],
        w_h=bf(params['w_h']), b_h=params['b_h'],
        w_out=bf(w_out), b_out=b_out,
        w_epi=bf(w_epi), b_epi=b_epi,
        D=D, C_in=C_in, K=K, A=A, CP=CP, K_pad=K_pad)


# ---------------------------------------------------------------------------
# Per-generation tile / VMEM selection
# ---------------------------------------------------------------------------
def _select_tiling(n_tokens, stream_bytes_per_row, resident_bytes):
    """Pick (TILE_N, vmem_limit_bytes) for the current chip generation.

    v5e/v6e have 128 MiB VMEM, v7x only 64 MiB per TC — never copy a tile size
    tuned on one generation to another; budget from get_tpu_info().
    """
    try:
        cap = int(getattr(pltpu.get_tpu_info(), "vmem_capacity_bytes", 128 << 20))
    except Exception:
        cap = 128 << 20
    vmem_limit = min(cap * 3 // 4, 96 << 20)              # 96 MiB v5e/v6e, 48 MiB v7x
    budget = vmem_limit - resident_bytes - (4 << 20)      # headroom for compiler scratch
    tile = budget // max(2 * stream_bytes_per_row, 1)     # double-buffered streamed rows
    tile = int(max(128, min(1024, tile)))
    tile = min(tile, _round_up(max(n_tokens, 8), 8))
    tile = max(8, (tile // 8) * 8)
    return tile, int(vmem_limit)


# ---------------------------------------------------------------------------
# Forward wrapper
# ---------------------------------------------------------------------------
def latent_diff_forward(pw, batch, *, pad_num, pad_chain_num, pad_entity_num,
                        tile_n=None):
    x = batch['xt_dict']['latent_rep']
    B, L, C_in = x.shape
    D = pw['D']
    ctx = batch['condition_embed']
    C_ctx = ctx.shape[-1]
    C_xc = C_in + C_ctx
    N = B * L

    # Per-batch conditioning (timestep + protein_state) -> one table segment,
    # instead of materializing an [N, D] broadcast in HBM.
    batch_cond = (timestep_embedding(batch['t'], D)
                  + jnp.take(pw['y_tab'], batch['protein_state'].astype(jnp.int32),
                             axis=0))                                   # [B, D]

    off_chain = pw['pos_tab'].shape[0]
    off_ent = off_chain + pw['chain_tab'].shape[0]
    off_batch = off_ent + pw['ent_tab'].shape[0]
    T = off_batch + B
    T_pad = _round_up(T, 128)
    fused_tab = jnp.concatenate(
        [pw['pos_tab'], pw['chain_tab'], pw['ent_tab'], batch_cond], axis=0)
    fused_tab = jnp.pad(fused_tab, ((0, T_pad - T), (0, 0)))
    # Fused input weight: [cond table ; w_in ; w_ctx] -> one MXU matmul in-kernel.
    w_in_fused = jnp.concatenate([fused_tab.astype(jnp.bfloat16), pw['w_xc']], axis=0)
    # TODO(synk): for long-sequence configs (T_pad >~ 512) precompute the
    # pos/chain/entity gathers with XLA and stream a [N, D] bf16 cond input
    # instead of the in-kernel multi-hot (keeps the VALU slot off the critical
    # path).

    CP, K_pad = pw['CP'], pw['K_pad']
    stream_bytes = 8 * 4 + C_xc * 2 + CP * 4 + K_pad * 4
    resident_bytes = (w_in_fused.size * 2 + pw['w_h'].size * 2
                      + pw['w_out'].size * 2 + pw['w_epi'].size * 2
                      + (pw['b_in'].size + pw['b_h'].size
                         + pw['b_out'].size + pw['b_epi'].size) * 4)
    tile_sel, vmem_limit = _select_tiling(N, stream_bytes, resident_bytes)
    TILE_N = tile_n if tile_n is not None else tile_sel
    N_pad = _round_up(N, TILE_N)

    # Streamed inputs: xc in bf16 (kernel only ever uses it in bf16), packed
    # int32 metadata.
    xc = jnp.concatenate([x.reshape(N, C_in),
                          ctx.reshape(N, C_ctx)], axis=-1).astype(jnp.bfloat16)
    xc = jnp.pad(xc, ((0, N_pad - N), (0, 0)))

    bidx = jnp.broadcast_to(jnp.arange(B, dtype=jnp.int32)[:, None], (B, L))
    zeros = jnp.zeros((B, L), jnp.int32)
    idx_pack = jnp.stack(
        [(batch['single_mask'] != 0).astype(jnp.int32),     # PyTorch bool() semantics
         batch['single_res_rel'].astype(jnp.int32),
         batch['chain_idx'].astype(jnp.int32),
         batch['entity_idx'].astype(jnp.int32),
         bidx, zeros, zeros, zeros], axis=-1).reshape(N, 8)
    idx_pack = jnp.pad(idx_pack, ((0, N_pad - N), (0, 0)))

    kernel = functools.partial(
        latent_diff_kernel,
        off_chain=off_chain, off_ent=off_ent, off_batch=off_batch,
        pad_num=pad_num, pad_chain_num=pad_chain_num,
        pad_entity_num=pad_entity_num)

    def build(single_buffer_resident):
        def tok_spec(width):
            return pl.BlockSpec((TILE_N, width), lambda i: (i, 0))

        def res_spec(arr):
            if single_buffer_resident:
                # Constant index_map: double-buffering these only burns VMEM.
                return pl.BlockSpec(arr.shape, lambda i: (0, 0),
                                    pipeline_mode=pl.Buffered(1))
            return pl.BlockSpec(arr.shape, lambda i: (0, 0))

        return pl.pallas_call(
            kernel,
            out_shape=(jax.ShapeDtypeStruct((N_pad, CP), jnp.float32),
                       jax.ShapeDtypeStruct((N_pad, K_pad), jnp.float32)),
            grid_spec=pltpu.PrefetchScalarGridSpec(
                num_scalar_prefetch=0,
                grid=(N_pad // TILE_N,),
                in_specs=[
                    tok_spec(8),             # packed int metadata
                    tok_spec(C_xc),          # concat(latent_rep, condition_embed) bf16
                    res_spec(w_in_fused), res_spec(pw['b_in']),
                    res_spec(pw['w_h']), res_spec(pw['b_h']),
                    res_spec(pw['w_out']), res_spec(pw['b_out']),
                    res_spec(pw['w_epi']), res_spec(pw['b_epi']),
                ],
                out_specs=[tok_spec(CP), tok_spec(K_pad)],
            ),
            compiler_params=pltpu.CompilerParams(
                dimension_semantics=("parallel",),   # v7x: shard tiles on 2 TCs
                vmem_limit_bytes=vmem_limit),
        )

    args = (idx_pack, xc, w_in_fused, pw['b_in'], pw['w_h'], pw['b_h'],
            pw['w_out'], pw['b_out'], pw['w_epi'], pw['b_epi'])
    try:
        out_p, l2_p = jax.block_until_ready(build(True)(*args))
    except Exception:
        # pl.Buffered(1) pipeline_mode not supported on this jax build; fall
        # back to default double buffering of the resident weights.
        out_p, l2_p = jax.block_until_ready(build(False)(*args))

    C, A, K = pw['C_in'], pw['A'], pw['K']
    pl_out = out_p[:N]
    pred_dict = {
        'pred_latent': pl_out[:, :C].reshape(B, L, C),
        'aatype_logits': pl_out[:, C:C + A].reshape(B, L, A),
        'l2_distance': l2_p[:N, :K].reshape(B, L, K),
    }
    # TODO(synk): fape/return_structure branch needs the external VQ decoder
    # (self.vqdecoder.codebook / .decode); omitted.
    # TODO(synk): if downstream tolerates it, emit l2_distance in bf16 (or an
    # in-kernel argmin) to cut the remaining dominant output stream in half.
    return pred_dict


# ---------------------------------------------------------------------------
# Pure-JAX reference (same bf16 matmul semantics) for a sanity check
# ---------------------------------------------------------------------------
def reference_forward(params, batch, *, pad_num, pad_chain_num, pad_entity_num):
    f32, bf16 = jnp.float32, jnp.bfloat16
    x = batch['xt_dict']['latent_rep'].astype(f32)
    B, L, C_in = x.shape
    D = params['w_h'].shape[0]
    N = B * L
    valid = (batch['single_mask'] != 0).reshape(N)
    mask = valid.astype(f32)[:, None]

    def remap(idx, pad_value):
        return jnp.where(valid, idx.astype(jnp.int32).reshape(N), pad_value)

    sidx = remap(batch['single_res_rel'], pad_num)
    cidx = remap(batch['chain_idx'], pad_chain_num)
    eidx = remap(batch['entity_idx'], pad_entity_num)
    bidx = jnp.broadcast_to(jnp.arange(B)[:, None], (B, L)).reshape(N)
    t_state = (timestep_embedding(batch['t'], D)
               + jnp.take(params['y_tab'], batch['protein_state'].astype(jnp.int32), axis=0))
    cond = (params['pos_tab'].astype(bf16)[sidx].astype(f32)
            + params['chain_tab'].astype(bf16)[cidx].astype(f32)
            + params['ent_tab'].astype(bf16)[eidx].astype(f32)
            + t_state.astype(bf16)[bidx].astype(f32))

    def mm(a, b):
        return jnp.dot(a.astype(bf16), b.astype(bf16), preferred_element_type=f32)

    xc = jnp.concatenate([x.reshape(N, C_in),
                          batch['condition_embed'].astype(f32).reshape(N, -1)], -1)
    w_xc = jnp.concatenate([params['w_in'], params['w_ctx']], axis=0)
    h = mm(xc, w_xc) + params['b_in']
    h = jax.nn.gelu(h + cond, approximate=True)
    h = jax.nn.gelu(mm(h, params['w_h']) + params['b_h'], approximate=True)
    pred = (mm(h, params['w_out']) + params['b_out']) * mask
    logits = mm(pred, params['w_nll']) + params['b_nll']
    cb = params['codebook']
    l2 = jnp.maximum(jnp.sum(pred * pred, -1, keepdims=True)
                     + jnp.sum(cb * cb, -1)[None, :] - 2.0 * mm(pred, cb.T), 0.0)
    K, A = cb.shape[0], params['w_nll'].shape[1]
    return dict(pred_latent=pred.reshape(B, L, C_in),
                aatype_logits=logits.reshape(B, L, A),
                l2_distance=l2.reshape(B, L, K))


if __name__ == "__main__":
    key = jax.random.PRNGKey(0)
    B, L = 2, 8
    in_channels = 32
    embed_dim = 32
    ctx_channels = 16
    max_seq_len, max_chain_len, max_entity_len = 32, 8, 8
    num_states, num_codes, num_aatype = 4, 64, 22
    pad_num, pad_chain_num, pad_entity_num = max_seq_len - 1, max_chain_len - 1, max_entity_len - 1

    kp, kx, kc = jax.random.split(key, 3)
    params = make_params(
        kp, in_channels=in_channels, embed_dim=embed_dim, ctx_channels=ctx_channels,
        max_seq_len=max_seq_len, max_chain_len=max_chain_len,
        max_entity_len=max_entity_len, num_states=num_states,
        num_codes=num_codes, num_aatype=num_aatype)
    packed = pack_weights(params)

    single_mask = jnp.concatenate(
        [jnp.ones((B, L - 2), jnp.float32), jnp.zeros((B, 2), jnp.float32)], axis=1)
    batch = {
        't': jnp.array([3, 17], dtype=jnp.int32),
        'protein_state': jnp.array([0, 2], dtype=jnp.int32),
        'single_mask': single_mask,
        'single_res_rel': jnp.broadcast_to(jnp.arange(L, dtype=jnp.int32)[None, :], (B, L)),
        'chain_idx': jnp.zeros((B, L), jnp.int32),
        'entity_idx': jnp.ones((B, L), jnp.int32),
        'xt_dict': {'latent_rep': jax.random.normal(kx, (B, L, in_channels), jnp.float32)},
        'condition_embed': jax.random.normal(kc, (B, L, ctx_channels), jnp.float32),
    }

    out = latent_diff_forward(packed, batch, pad_num=pad_num,
                              pad_chain_num=pad_chain_num,
                              pad_entity_num=pad_entity_num)
    jax.block_until_ready(out)

    assert out['pred_latent'].shape == (B, L, in_channels)
    assert out['l2_distance'].shape == (B, L, num_codes)
    assert out['aatype_logits'].shape == (B, L, num_aatype)
    assert all(bool(jnp.all(jnp.isfinite(v))) for v in out.values())
    assert bool(jnp.all(out['l2_distance'] >= 0.0))

    ref = reference_forward(params, batch, pad_num=pad_num,
                            pad_chain_num=pad_chain_num,
                            pad_entity_num=pad_entity_num)
    for name in ('pred_latent', 'aatype_logits', 'l2_distance'):
        err = float(jnp.max(jnp.abs(out[name] - ref[name])))
        assert err < 5e-2, (name, err)

    print("KERNEL_OK")
</pallas_src>

<mosaic_0001>
module attributes {stable_mosaic.version = 11 : i64} {
  func.func @latent_diff_kernel(%arg0: i32, %arg1: memref<16x8xi32, #tpu.memory_space<vmem>>, %arg2: memref<16x48xbf16, #tpu.memory_space<vmem>>, %arg3: memref<176x32xbf16, #tpu.memory_space<vmem>>, %arg4: memref<1x32xf32, #tpu.memory_space<vmem>>, %arg5: memref<32x32xbf16, #tpu.memory_space<vmem>>, %arg6: memref<1x32xf32, #tpu.memory_space<vmem>>, %arg7: memref<32x128xbf16, #tpu.memory_space<vmem>>, %arg8: memref<1x128xf32, #tpu.memory_space<vmem>>, %arg9: memref<128x256xbf16, #tpu.memory_space<vmem>>, %arg10: memref<1x256xf32, #tpu.memory_space<vmem>>, %arg11: memref<16x128xf32, #tpu.memory_space<vmem>>, %arg12: memref<16x128xf32, #tpu.memory_space<vmem>>) attributes {dimension_semantics = [#tpu.dimension_semantics<parallel>], iteration_bounds = array<i64: 1>, scalar_prefetch = 0 : i64, scratch_operands = 0 : i64, tpu.core_type = #tpu.core_type<tc>, window_params = [{transform_indices = @transform_0, window_bounds = array<i64: 16, 8>}, {transform_indices = @transform_1, window_bounds = array<i64: 16, 48>}, {pipeline_mode = #tpu.pipeline_mode<synchronous>, transform_indices = @transform_2, window_bounds = array<i64: 176, 32>}, {pipeline_mode = #tpu.pipeline_mode<synchronous>, transform_indices = @transform_3, window_bounds = array<i64: 1, 32>}, {pipeline_mode = #tpu.pipeline_mode<synchronous>, transform_indices = @transform_4, window_bounds = array<i64: 32, 32>}, {pipeline_mode = #tpu.pipeline_mode<synchronous>, transform_indices = @transform_5, window_bounds = array<i64: 1, 32>}, {pipeline_mode = #tpu.pipeline_mode<synchronous>, transform_indices = @transform_6, window_bounds = array<i64: 32, 128>}, {pipeline_mode = #tpu.pipeline_mode<synchronous>, transform_indices = @transform_7, window_bounds = array<i64: 1, 128>}, {pipeline_mode = #tpu.pipeline_mode<synchronous>, transform_indices = @transform_8, window_bounds = array<i64: 128, 256>}, {pipeline_mode = #tpu.pipeline_mode<synchronous>, transform_indices = @transform_9, window_bounds = array<i64: 1, 256>}, {transform_indices = @transform_10, window_bounds = array<i64: 16, 128>}, {transform_indices = @transform_11, window_bounds = array<i64: 16, 128>}]} {
    %c0 = arith.constant 0 : index
    %c0_0 = arith.constant 0 : index
    %0 = vector.load %arg1[%c0, %c0_0] : memref<16x8xi32, #tpu.memory_space<vmem>>, vector<16x1xi32>
    %c0_i32 = arith.constant 0 : i32
    %1 = vector.broadcast %c0_i32 : i32 to vector<16x1xi32>
    %2 = arith.cmpi eq, %0, %1 : vector<16x1xi32>
    %c0_i32_1 = arith.constant 0 : i32
    %3 = vector.broadcast %c0_i32_1 : i32 to vector<16x1xi32>
    %4 = arith.cmpi ne, %0, %3 : vector<16x1xi32>
    %5 = arith.extui %4 : vector<16x1xi1> to vector<16x1xi32>
    %6 = arith.sitofp %5 : vector<16x1xi32> to vector<16x1xf32>
    %7 = tpu.iota {dimensions = array<i32: 1>} : vector<1x128xi32>
    %c0_2 = arith.constant 0 : index
    %c1 = arith.constant 1 : index
    %8 = vector.load %arg1[%c0_2, %c1] : memref<16x8xi32, #tpu.memory_space<vmem>>, vector<16x1xi32>
    %c31_i32 = arith.constant 31 : i32
    %9 = vector.broadcast %c31_i32 : i32 to vector<16x1xi32>
    %10 = arith.select %2, %9, %8 : vector<16x1xi1>, vector<16x1xi32>
    %c0_i32_3 = arith.constant 0 : i32
    %11 = vector.broadcast %c0_i32_3 : i32 to vector<16x1xi32>
    %12 = arith.addi %10, %11 : vector<16x1xi32>
    %13 = vector.broadcast %7 : vector<1x128xi32> to vector<16x128xi32>
    %14 = vector.broadcast %12 : vector<16x1xi32> to vector<16x128xi32>
    %15 = arith.cmpi eq, %13, %14 : vector<16x128xi32>
    %c0_4 = arith.constant 0 : index
    %c2 = arith.constant 2 : index
    %16 = vector.load %arg1[%c0_4, %c2] : memref<16x8xi32, #tpu.memory_space<vmem>>, vector<16x1xi32>
    %c7_i32 = arith.constant 7 : i32
    %17 = vector.broadcast %c7_i32 : i32 to vector<16x1xi32>
    %18 = arith.select %2, %17, %16 : vector<16x1xi1>, vector<16x1xi32>
    %c32_i32 = arith.constant 32 : i32
    %19 = vector.broadcast %c32_i32 : i32 to vector<16x1xi32>
    %20 = arith.addi %18, %19 : vector<16x1xi32>
    %21 = vector.broadcast %7 : vector<1x128xi32> to vector<16x128xi32>
    %22 = vector.broadcast %20 : vector<16x1xi32> to vector<16x128xi32>
    %23 = arith.cmpi eq, %21, %22 : vector<16x128xi32>
    %24 = arith.ori %15, %23 : vector<16x128xi1>
    %c0_5 = arith.constant 0 : index
    %c3 = arith.constant 3 : index
    %25 = vector.load %arg1[%c0_5, %c3] : memref<16x8xi32, #tpu.memory_space<vmem>>, vector<16x1xi32>
    %c7_i32_6 = arith.constant 7 : i32
    %26 = vector.broadcast %c7_i32_6 : i32 to vector<16x1xi32>
    %27 = arith.select %2, %26, %25 : vector<16x1xi1>, vector<16x1xi32>
    %c40_i32 = arith.constant 40 : i32
    %28 = vector.broadcast %c40_i32 : i32 to vector<16x1xi32>
    %29 = arith.addi %27, %28 : vector<16x1xi32>
    %30 = vector.broadcast %7 : vector<1x128xi32> to vector<16x128xi32>
    %31 = vector.broadcast %29 : vector<16x1xi32> to vector<16x128xi32>
    %32 = arith.cmpi eq, %30, %31 : vector<16x128xi32>
    %33 = arith.ori %24, %32 : vector<16x128xi1>
    %c0_7 = arith.constant 0 : index
    %c4 = arith.constant 4 : index
    %34 = vector.load %arg1[%c0_7, %c4] : memref<16x8xi32, #tpu.memory_space<vmem>>, vector<16x1xi32>
    %c48_i32 = arith.constant 48 : i32
    %35 = vector.broadcast %c48_i32 : i32 to vector<16x1xi32>
    %36 = arith.addi %34, %35 : vector<16x1xi32>
    %37 = vector.broadcast %7 : vector<1x128xi32> to vector<16x128xi32>
    %38 = vector.broadcast %36 : vector<16x1xi32> to vector<16x128xi32>
    %39 = arith.cmpi eq, %37, %38 : vector<16x128xi32>
    %40 = arith.ori %33, %39 : vector<16x128xi1>
    %41 = arith.extui %40 : vector<16x128xi1> to vector<16x128xi32>
    %42 = arith.sitofp %41 : vector<16x128xi32> to vector<16x128xf32>
    %43 = arith.truncf %42 : vector<16x128xf32> to vector<16x128xbf16>
    %c0_8 = arith.constant 0 : index
    %c0_9 = arith.constant 0 : index
    %44 = vector.load %arg2[%c0_8, %c0_9] : memref<16x48xbf16, #tpu.memory_space<vmem>>, vector<16x48xbf16>
    %45 = tpu.concatenate %43, %44 in 1 : vector<16x128xbf16>, vector<16x48xbf16> -> vector<16x176xbf16>
    %c0_10 = arith.constant 0 : index
    %c0_11 = arith.constant 0 : index
    %46 = vector.load %arg3[%c0_10, %c0_11] : memref<176x32xbf16, #tpu.memory_space<vmem>>, vector<176x32xbf16>
    %cst = arith.constant dense<0.000000e+00> : vector<16x32xf32>
    %47 = tpu.matmul %45, %46, %cst {dimension_numbers = #tpu.dot_dimension_numbers<[1], [0], [0], [1], [0, 0, 1, 1], [], []>} : vector<16x176xbf16>, vector<176x32xbf16>, vector<16x32xf32> -> vector<16x32xf32>
    %c0_12 = arith.constant 0 : index
    %c0_13 = arith.constant 0 : index
    %48 = vector.load %arg4[%c0_12, %c0_13] : memref<1x32xf32, #tpu.memory_space<vmem>>, vector<1x32xf32>
    %49 = vector.broadcast %48 : vector<1x32xf32> to vector<16x32xf32>
    %50 = arith.addf %47, %49 : vector<16x32xf32>
    %51 = arith.mulf %50, %50 : vector<16x32xf32>
    %52 = arith.mulf %50, %51 : vector<16x32xf32>
    %cst_14 = arith.constant 4.471500e-02 : f32
    %53 = vector.broadcast %cst_14 : f32 to vector<16x32xf32>
    %54 = arith.mulf %53, %52 : vector<16x32xf32>
    %55 = arith.addf %50, %54 : vector<16x32xf32>
    %cst_15 = arith.constant 0.797884583 : f32
    %56 = vector.broadcast %cst_15 : f32 to vector<16x32xf32>
    %57 = arith.mulf %56, %55 : vector<16x32xf32>
    %58 = math.tanh %57 : vector<16x32xf32>
    %cst_16 = arith.constant 1.000000e+00 : f32
    %59 = vector.broadcast %cst_16 : f32 to vector<16x32xf32>
    %60 = arith.addf %59, %58 : vector<16x32xf32>
    %cst_17 = arith.constant 5.000000e-01 : f32
    %61 = vector.broadcast %cst_17 : f32 to vector<16x32xf32>
    %62 = arith.mulf %61, %60 : vector<16x32xf32>
    %63 = arith.mulf %50, %62 : vector<16x32xf32>
    %64 = arith.truncf %63 : vector<16x32xf32> to vector<16x32xbf16>
    %c0_18 = arith.constant 0 : index
    %c0_19 = arith.constant 0 : index
    %65 = vector.load %arg5[%c0_18, %c0_19] : memref<32x32xbf16, #tpu.memory_space<vmem>>, vector<32x32xbf16>
    %cst_20 = arith.constant dense<0.000000e+00> : vector<16x32xf32>
    %66 = tpu.matmul %64, %65, %cst_20 {dimension_numbers = #tpu.dot_dimension_numbers<[1], [0], [0], [1], [0, 0, 1, 1], [], []>} : vector<16x32xbf16>, vector<32x32xbf16>, vector<16x32xf32> -> vector<16x32xf32>
    %c0_21 = arith.constant 0 : index
    %c0_22 = arith.constant 0 : index
    %67 = vector.load %arg6[%c0_21, %c0_22] : memref<1x32xf32, #tpu.memory_space<vmem>>, vector<1x32xf32>
    %68 = vector.broadcast %67 : vector<1x32xf32> to vector<16x32xf32>
    %69 = arith.addf %66, %68 : vector<16x32xf32>
    %70 = arith.mulf %69, %69 : vector<16x32xf32>
    %71 = arith.mulf %69, %70 : vector<16x32xf32>
    %cst_23 = arith.constant 4.471500e-02 : f32
    %72 = vector.broadcast %cst_23 : f32 to vector<16x32xf32>
    %73 = arith.mulf %72, %71 : vector<16x32xf32>
    %74 = arith.addf %69, %73 : vector<16x32xf32>
    %cst_24 = arith.constant 0.797884583 : f32
    %75 = vector.broadcast %cst_24 : f32 to vector<16x32xf32>
    %76 = arith.mulf %75, %74 : vector<16x32xf32>
    %77 = math.tanh %76 : vector<16x32xf32>
    %cst_25 = arith.constant 1.000000e+00 : f32
    %78 = vector.broadcast %cst_25 : f32 to vector<16x32xf32>
    %79 = arith.addf %78, %77 : vector<16x32xf32>
    %cst_26 = arith.constant 5.000000e-01 : f32
    %80 = vector.broadcast %cst_26 : f32 to vector<16x32xf32>
    %81 = arith.mulf %80, %79 : vector<16x32xf32>
    %82 = arith.mulf %69, %81 : vector<16x32xf32>
    %83 = arith.truncf %82 : vector<16x32xf32> to vector<16x32xbf16>
    %c0_27 = arith.constant 0 : index
    %c0_28 = arith.constant 0 : index
    %84 = vector.load %arg7[%c0_27, %c0_28] : memref<32x128xbf16, #tpu.memory_space<vmem>>, vector<32x128xbf16>
    %cst_29 = arith.constant dense<0.000000e+00> : vector<16x128xf32>
    %85 = tpu.matmul %83, %84, %cst_29 {dimension_numbers = #tpu.dot_dimension_numbers<[1], [0], [0], [1], [0, 0, 1, 1], [], []>} : vector<16x32xbf16>, vector<32x128xbf16>, vector<16x128xf32> -> vector<16x128xf32>
    %c0_30 = arith.constant 0 : index
    %c0_31 = arith.constant 0 : index
    %86 = vector.load %arg8[%c0_30, %c0_31] : memref<1x128xf32, #tpu.memory_space<vmem>>, vector<1x128xf32>
    %87 = vector.broadcast %86 : vector<1x128xf32> to vector<16x128xf32>
    %88 = arith.addf %85, %87 : vector<16x128xf32>
    %89 = vector.broadcast %6 : vector<16x1xf32> to vector<16x128xf32>
    %90 = arith.mulf %88, %89 : vector<16x128xf32>
    %91 = arith.truncf %90 : vector<16x128xf32> to vector<16x128xbf16>
    %c0_32 = arith.constant 0 : index
    %c0_33 = arith.constant 0 : index
    %92 = vector.load %arg9[%c0_32, %c0_33] : memref<128x256xbf16, #tpu.memory_space<vmem>>, vector<128x256xbf16>
    %cst_34 = arith.constant dense<0.000000e+00> : vector<16x256xf32>
    %93 = tpu.matmul %91, %92, %cst_34 {dimension_numbers = #tpu.dot_dimension_numbers<[1], [0], [0], [1], [0, 0, 1, 1], [], []>} : vector<16x128xbf16>, vector<128x256xbf16>, vector<16x256xf32> -> vector<16x256xf32>
    %c0_35 = arith.constant 0 : index
    %c0_36 = arith.constant 0 : index
    %94 = vector.load %arg10[%c0_35, %c0_36] : memref<1x256xf32, #tpu.memory_space<vmem>>, vector<1x256xf32>
    %95 = vector.broadcast %94 : vector<1x256xf32> to vector<16x256xf32>
    %96 = arith.addf %93, %95 : vector<16x256xf32>
    %97 = arith.mulf %90, %90 : vector<16x128xf32>
    %cst_37 = arith.constant dense<0.000000e+00> : vector<16xf32>
    %98 = vector.multi_reduction <add>, %97, %cst_37 [1] : vector<16x128xf32> to vector<16xf32>
    %99 = vector.shape_cast %98 : vector<16xf32> to vector<16x1xf32>
    %100 = vector.extract_strided_slice %96 {offsets = [0, 0], sizes = [16, 128], strides = [1, 1]} : vector<16x256xf32> to vector<16x128xf32>
    %101 = vector.broadcast %99 : vector<16x1xf32> to vector<16x128xf32>
    %102 = arith.addf %101, %100 : vector<16x128xf32>
    %cst_38 = arith.constant 0.000000e+00 : f32
    %103 = vector.broadcast %cst_38 : f32 to vector<16x128xf32>
    %104 = arith.maximumf %102, %103 : vector<16x128xf32>
    %c0_39 = arith.constant 0 : index
    %c0_40 = arith.constant 0 : index
    %105 = vector.load %arg12[%c0_39, %c0_40] : memref<16x128xf32, #tpu.memory_space<vmem>>, vector<16x128xf32>
    tpu.vector_store %arg12[%c0_39, %c0_40], %104 {strides = array<i32>} : memref<16x128xf32, #tpu.memory_space<vmem>>, vector<16x128xf32>,
    %106 = vector.extract_strided_slice %96 {offsets = [0, 128], sizes = [16, 128], strides = [1, 1]} : vector<16x256xf32> to vector<16x128xf32>
    %107 = arith.addf %90, %106 : vector<16x128xf32>
    %c0_41 = arith.constant 0 : index
    %c0_42 = arith.constant 0 : index
    %108 = vector.load %arg11[%c0_41, %c0_42] : memref<16x128xf32, #tpu.memory_space<vmem>>, vector<16x128xf32>
    tpu.vector_store %arg11[%c0_41, %c0_42], %107 {strides = array<i32>} : memref<16x128xf32, #tpu.memory_space<vmem>>, vector<16x128xf32>,
    return
  }
  func.func @transform_0(%arg0: i32) -> (i32, i32) {
    %c0_i32 = arith.constant 0 : i32
    %c0_i32_0 = arith.constant 0 : i32
    return %arg0, %c0_i32 : i32, i32
  }
  func.func @transform_1(%arg0: i32) -> (i32, i32) {
    %c0_i32 = arith.constant 0 : i32
    %c0_i32_0 = arith.constant 0 : i32
    return %arg0, %c0_i32 : i32, i32
  }
  func.func @transform_2(%arg0: i32) -> (i32, i32) {
    %c0_i32 = arith.constant 0 : i32
    %c0_i32_0 = arith.constant 0 : i32
    %c0_i32_1 = arith.constant 0 : i32
    return %c0_i32, %c0_i32_0 : i32, i32
  }
  func.func @transform_3(%arg0: i32) -> (i32, i32) {
    %c0_i32 = arith.constant 0 : i32
    %c0_i32_0 = arith.constant 0 : i32
    %c0_i32_1 = arith.constant 0 : i32
    return %c0_i32, %c0_i32_0 : i32, i32
  }
  func.func @transform_4(%arg0: i32) -> (i32, i32) {
    %c0_i32 = arith.constant 0 : i32
    %c0_i32_0 = arith.constant 0 : i32
    %c0_i32_1 = arith.constant 0 : i32
    return %c0_i32, %c0_i32_0 : i32, i32
  }
  func.func @transform_5(%arg0: i32) -> (i32, i32) {
    %c0_i32 = arith.constant 0 : i32
    %c0_i32_0 = arith.constant 0 : i32
    %c0_i32_1 = arith.constant 0 : i32
    return %c0_i32, %c0_i32_0 : i32, i32
  }
  func.func @transform_6(%arg0: i32) -> (i32, i32) {
    %c0_i32 = arith.constant 0 : i32
    %c0_i32_0 = arith.constant 0 : i32
    %c0_i32_1 = arith.constant 0 : i32
    return %c0_i32, %c0_i32_0 : i32, i32
  }
  func.func @transform_7(%arg0: i32) -> (i32, i32) {
    %c0_i32 = arith.constant 0 : i32
    %c0_i32_0 = arith.constant 0 : i32
    %c0_i32_1 = arith.constant 0 : i32
    return %c0_i32, %c0_i32_0 : i32, i32
  }
  func.func @transform_8(%arg0: i32) -> (i32, i32) {
    %c0_i32 = arith.constant 0 : i32
    %c0_i32_0 = arith.constant 0 : i32
    %c0_i32_1 = arith.constant 0 : i32
    return %c0_i32, %c0_i32_0 : i32, i32
  }
  func.func @transform_9(%arg0: i32) -> (i32, i32) {
    %c0_i32 = arith.constant 0 : i32
    %c0_i32_0 = arith.constant 0 : i32
    %c0_i32_1 = arith.constant 0 : i32
    return %c0_i32, %c0_i32_0 : i32, i32
  }
  func.func @transform_10(%arg0: i32) -> (i32, i32) {
    %c0_i32 = arith.constant 0 : i32
    %c0_i32_0 = arith.constant 0 : i32
    return %arg0, %c0_i32 : i32, i32
  }
  func.func @transform_11(%arg0: i32) -> (i32, i32) {
    %c0_i32 = arith.constant 0 : i32
    %c0_i32_0 = arith.constant 0 : i32
    return %arg0, %c0_i32 : i32, i32
  }
}

module attributes {stable_mosaic.version = 11 : i64} {
  func.func @latent_diff_kernel(%arg0: i32, %arg1: memref<16x8xi32, #tpu.memory_space<vmem>>, %arg2: memref<16x48xbf16, #tpu.memory_space<vmem>>, %arg3: memref<176x32xbf16, #tpu.memory_space<vmem>>, %arg4: memref<1x32xf32, #tpu.memory_space<vmem>>, %arg5: memref<32x32xbf16, #tpu.memory_space<vmem>>, %arg6: memref<1x32xf32, #tpu.memory_space<vmem>>, %arg7: memref<32x128xbf16, #tpu.memory_space<vmem>>, %arg8: memref<1x128xf32, #tpu.memory_space<vmem>>, %arg9: memref<128x256xbf16, #tpu.memory_space<vmem>>, %arg10: memref<1x256xf32, #tpu.memory_space<vmem>>, %arg11: memref<16x128xf32, #tpu.memory_space<vmem>>, %arg12: memref<16x128xf32, #tpu.memory_space<vmem>>) attributes {dimension_semantics = [#tpu.dimension_semantics<parallel>], iteration_bounds = array<i64: 1>, scalar_prefetch = 0 : i64, scratch_operands = 0 : i64, tpu.core_type = #tpu.core_type<tc>, window_params = [{transform_indices = @transform_0, window_bounds = array<i64: 16, 8>}, {transform_indices = @transform_1, window_bounds = array<i64: 16, 48>}, {pipeline_mode = #tpu.pipeline_mode<synchronous>, transform_indices = @transform_2, window_bounds = array<i64: 176, 32>}, {pipeline_mode = #tpu.pipeline_mode<synchronous>, transform_indices = @transform_3, window_bounds = array<i64: 1, 32>}, {pipeline_mode = #tpu.pipeline_mode<synchronous>, transform_indices = @transform_4, window_bounds = array<i64: 32, 32>}, {pipeline_mode = #tpu.pipeline_mode<synchronous>, transform_indices = @transform_5, window_bounds = array<i64: 1, 32>}, {pipeline_mode = #tpu.pipeline_mode<synchronous>, transform_indices = @transform_6, window_bounds = array<i64: 32, 128>}, {pipeline_mode = #tpu.pipeline_mode<synchronous>, transform_indices = @transform_7, window_bounds = array<i64: 1, 128>}, {pipeline_mode = #tpu.pipeline_mode<synchronous>, transform_indices = @transform_8, window_bounds = array<i64: 128, 256>}, {pipeline_mode = #tpu.pipeline_mode<synchronous>, transform_indices = @transform_9, window_bounds = array<i64: 1, 256>}, {transform_indices = @transform_10, window_bounds = array<i64: 16, 128>}, {transform_indices = @transform_11, window_bounds = array<i64: 16, 128>}]} {
    %c0 = arith.constant 0 : index
    %c0_0 = arith.constant 0 : index
    %0 = vector.load %arg1[%c0, %c0_0] : memref<16x8xi32, #tpu.memory_space<vmem>>, vector<16x1xi32>
    %c0_i32 = arith.constant 0 : i32
    %1 = vector.broadcast %c0_i32 : i32 to vector<16x1xi32>
    %2 = arith.cmpi eq, %0, %1 : vector<16x1xi32>
    %c0_i32_1 = arith.constant 0 : i32
    %3 = vector.broadcast %c0_i32_1 : i32 to vector<16x1xi32>
    %4 = arith.cmpi ne, %0, %3 : vector<16x1xi32>
    %5 = arith.extui %4 : vector<16x1xi1> to vector<16x1xi32>
    %6 = arith.sitofp %5 : vector<16x1xi32> to vector<16x1xf32>
    %7 = tpu.iota {dimensions = array<i32: 1>} : vector<1x128xi32>
    %c0_2 = arith.constant 0 : index
    %c1 = arith.constant 1 : index
    %8 = vector.load %arg1[%c0_2, %c1] : memref<16x8xi32, #tpu.memory_space<vmem>>, vector<16x1xi32>
    %c31_i32 = arith.constant 31 : i32
    %9 = vector.broadcast %c31_i32 : i32 to vector<16x1xi32>
    %10 = arith.select %2, %9, %8 : vector<16x1xi1>, vector<16x1xi32>
    %c0_i32_3 = arith.constant 0 : i32
    %11 = vector.broadcast %c0_i32_3 : i32 to vector<16x1xi32>
    %12 = arith.addi %10, %11 : vector<16x1xi32>
    %13 = vector.broadcast %7 : vector<1x128xi32> to vector<16x128xi32>
    %14 = vector.broadcast %12 : vector<16x1xi32> to vector<16x128xi32>
    %15 = arith.cmpi eq, %13, %14 : vector<16x128xi32>
    %c0_4 = arith.constant 0 : index
    %c2 = arith.constant 2 : index
    %16 = vector.load %arg1[%c0_4, %c2] : memref<16x8xi32, #tpu.memory_space<vmem>>, vector<16x1xi32>
    %c7_i32 = arith.constant 7 : i32
    %17 = vector.broadcast %c7_i32 : i32 to vector<16x1xi32>
    %18 = arith.select %2, %17, %16 : vector<16x1xi1>, vector<16x1xi32>
    %c32_i32 = arith.constant 32 : i32
    %19 = vector.broadcast %c32_i32 : i32 to vector<16x1xi32>
    %20 = arith.addi %18, %19 : vector<16x1xi32>
    %21 = vector.broadcast %7 : vector<1x128xi32> to vector<16x128xi32>
    %22 = vector.broadcast %20 : vector<16x1xi32> to vector<16x128xi32>
    %23 = arith.cmpi eq, %21, %22 : vector<16x128xi32>
    %24 = arith.ori %15, %23 : vector<16x128xi1>
    %c0_5 = arith.constant 0 : index
    %c3 = arith.constant 3 : index
    %25 = vector.load %arg1[%c0_5, %c3] : memref<16x8xi32, #tpu.memory_space<vmem>>, vector<16x1xi32>
    %c7_i32_6 = arith.constant 7 : i32
    %26 = vector.broadcast %c7_i32_6 : i32 to vector<16x1xi32>
    %27 = arith.select %2, %26, %25 : vector<16x1xi1>, vector<16x1xi32>
    %c40_i32 = arith.constant 40 : i32
    %28 = vector.broadcast %c40_i32 : i32 to vector<16x1xi32>
    %29 = arith.addi %27, %28 : vector<16x1xi32>
    %30 = vector.broadcast %7 : vector<1x128xi32> to vector<16x128xi32>
    %31 = vector.broadcast %29 : vector<16x1xi32> to vector<16x128xi32>
    %32 = arith.cmpi eq, %30, %31 : vector<16x128xi32>
    %33 = arith.ori %24, %32 : vector<16x128xi1>
    %c0_7 = arith.constant 0 : index
    %c4 = arith.constant 4 : index
    %34 = vector.load %arg1[%c0_7, %c4] : memref<16x8xi32, #tpu.memory_space<vmem>>, vector<16x1xi32>
    %c48_i32 = arith.constant 48 : i32
    %35 = vector.broadcast %c48_i32 : i32 to vector<16x1xi32>
    %36 = arith.addi %34, %35 : vector<16x1xi32>
    %37 = vector.broadcast %7 : vector<1x128xi32> to vector<16x128xi32>
    %38 = vector.broadcast %36 : vector<16x1xi32> to vector<16x128xi32>
    %39 = arith.cmpi eq, %37, %38 : vector<16x128xi32>
    %40 = arith.ori %33, %39 : vector<16x128xi1>
    %41 = arith.extui %40 : vector<16x128xi1> to vector<16x128xi32>
    %42 = arith.sitofp %41 : vector<16x128xi32> to vector<16x128xf32>
    %43 = arith.truncf %42 : vector<16x128xf32> to vector<16x128xbf16>
    %c0_8 = arith.constant 0 : index
    %c0_9 = arith.constant 0 : index
    %44 = vector.load %arg2[%c0_8, %c0_9] : memref<16x48xbf16, #tpu.memory_space<vmem>>, vector<16x48xbf16>
    %45 = tpu.concatenate %43, %44 in 1 : vector<16x128xbf16>, vector<16x48xbf16> -> vector<16x176xbf16>
    %c0_10 = arith.constant 0 : index
    %c0_11 = arith.constant 0 : index
    %46 = vector.load %arg3[%c0_10, %c0_11] : memref<176x32xbf16, #tpu.memory_space<vmem>>, vector<176x32xbf16>
    %cst = arith.constant dense<0.000000e+00> : vector<16x32xf32>
    %47 = tpu.matmul %45, %46, %cst {dimension_numbers = #tpu.dot_dimension_numbers<[1], [0], [0], [1], [0, 0, 1, 1], [], []>} : vector<16x176xbf16>, vector<176x32xbf16>, vector<16x32xf32> -> vector<16x32xf32>
    %c0_12 = arith.constant 0 : index
    %c0_13 = arith.constant 0 : index
    %48 = vector.load %arg4[%c0_12, %c0_13] : memref<1x32xf32, #tpu.memory_space<vmem>>, vector<1x32xf32>
    %49 = vector.broadcast %48 : vector<1x32xf32> to vector<16x32xf32>
    %50 = arith.addf %47, %49 : vector<16x32xf32>
    %51 = arith.mulf %50, %50 : vector<16x32xf32>
    %52 = arith.mulf %50, %51 : vector<16x32xf32>
    %cst_14 = arith.constant 4.471500e-02 : f32
    %53 = vector.broadcast %cst_14 : f32 to vector<16x32xf32>
    %54 = arith.mulf %53, %52 : vector<16x32xf32>
    %55 = arith.addf %50, %54 : vector<16x32xf32>
    %cst_15 = arith.constant 0.797884583 : f32
    %56 = vector.broadcast %cst_15 : f32 to vector<16x32xf32>
    %57 = arith.mulf %56, %55 : vector<16x32xf32>
    %58 = math.tanh %57 : vector<16x32xf32>
    %cst_16 = arith.constant 1.000000e+00 : f32
    %59 = vector.broadcast %cst_16 : f32 to vector<16x32xf32>
    %60 = arith.addf %59, %58 : vector<16x32xf32>
    %cst_17 = arith.constant 5.000000e-01 : f32
    %61 = vector.broadcast %cst_17 : f32 to vector<16x32xf32>
    %62 = arith.mulf %61, %60 : vector<16x32xf32>
    %63 = arith.mulf %50, %62 : vector<16x32xf32>
    %64 = arith.truncf %63 : vector<16x32xf32> to vector<16x32xbf16>
    %c0_18 = arith.constant 0 : index
    %c0_19 = arith.constant 0 : index
    %65 = vector.load %arg5[%c0_18, %c0_19] : memref<32x32xbf16, #tpu.memory_space<vmem>>, vector<32x32xbf16>
    %cst_20 = arith.constant dense<0.000000e+00> : vector<16x32xf32>
    %66 = tpu.matmul %64, %65, %cst_20 {dimension_numbers = #tpu.dot_dimension_numbers<[1], [0], [0], [1], [0, 0, 1, 1], [], []>} : vector<16x32xbf16>, vector<32x32xbf16>, vector<16x32xf32> -> vector<16x32xf32>
    %c0_21 = arith.constant 0 : index
    %c0_22 = arith.constant 0 : index
    %67 = vector.load %arg6[%c0_21, %c0_22] : memref<1x32xf32, #tpu.memory_space<vmem>>, vector<1x32xf32>
    %68 = vector.broadcast %67 : vector<1x32xf32> to vector<16x32xf32>
    %69 = arith.addf %66, %68 : vector<16x32xf32>
    %70 = arith.mulf %69, %69 : vector<16x32xf32>
    %71 = arith.mulf %69, %70 : vector<16x32xf32>
    %cst_23 = arith.constant 4.471500e-02 : f32
    %72 = vector.broadcast %cst_23 : f32 to vector<16x32xf32>
    %73 = arith.mulf %72, %71 : vector<16x32xf32>
    %74 = arith.addf %69, %73 : vector<16x32xf32>
    %cst_24 = arith.constant 0.797884583 : f32
    %75 = vector.broadcast %cst_24 : f32 to vector<16x32xf32>
    %76 = arith.mulf %75, %74 : vector<16x32xf32>
    %77 = math.tanh %76 : vector<16x32xf32>
    %cst_25 = arith.constant 1.000000e+00 : f32
    %78 = vector.broadcast %cst_25 : f32 to vector<16x32xf32>
    %79 = arith.addf %78, %77 : vector<16x32xf32>
    %cst_26 = arith.constant 5.000000e-01 : f32
    %80 = vector.broadcast %cst_26 : f32 to vector<16x32xf32>
    %81 = arith.mulf %80, %79 : vector<16x32xf32>
    %82 = arith.mulf %69, %81 : vector<16x32xf32>
    %83 = arith.truncf %82 : vector<16x32xf32> to vector<16x32xbf16>
    %c0_27 = arith.constant 0 : index
    %c0_28 = arith.constant 0 : index
    %84 = vector.load %arg7[%c0_27, %c0_28] : memref<32x128xbf16, #tpu.memory_space<vmem>>, vector<32x128xbf16>
    %cst_29 = arith.constant dense<0.000000e+00> : vector<16x128xf32>
    %85 = tpu.matmul %83, %84, %cst_29 {dimension_numbers = #tpu.dot_dimension_numbers<[1], [0], [0], [1], [0, 0, 1, 1], [], []>} : vector<16x32xbf16>, vector<32x128xbf16>, vector<16x128xf32> -> vector<16x128xf32>
    %c0_30 = arith.constant 0 : index
    %c0_31 = arith.constant 0 : index
    %86 = vector.load %arg8[%c0_30, %c0_31] : memref<1x128xf32, #tpu.memory_space<vmem>>, vector<1x128xf32>
    %87 = vector.broadcast %86 : vector<1x128xf32> to vector<16x128xf32>
    %88 = arith.addf %85, %87 : vector<16x128xf32>
    %89 = vector.broadcast %6 : vector<16x1xf32> to vector<16x128xf32>
    %90 = arith.mulf %88, %89 : vector<16x128xf32>
    %91 = arith.truncf %90 : vector<16x128xf32> to vector<16x128xbf16>
    %c0_32 = arith.constant 0 : index
    %c0_33 = arith.constant 0 : index
    %92 = vector.load %arg9[%c0_32, %c0_33] : memref<128x256xbf16, #tpu.memory_space<vmem>>, vector<128x256xbf16>
    %cst_34 = arith.constant dense<0.000000e+00> : vector<16x256xf32>
    %93 = tpu.matmul %91, %92, %cst_34 {dimension_numbers = #tpu.dot_dimension_numbers<[1], [0], [0], [1], [0, 0, 1, 1], [], []>} : vector<16x128xbf16>, vector<128x256xbf16>, vector<16x256xf32> -> vector<16x256xf32>
    %c0_35 = arith.constant 0 : index
    %c0_36 = arith.constant 0 : index
    %94 = vector.load %arg10[%c0_35, %c0_36] : memref<1x256xf32, #tpu.memory_space<vmem>>, vector<1x256xf32>
    %95 = vector.broadcast %94 : vector<1x256xf32> to vector<16x256xf32>
    %96 = arith.addf %93, %95 : vector<16x256xf32>
    %97 = arith.mulf %90, %90 : vector<16x128xf32>
    %cst_37 = arith.constant dense<0.000000e+00> : vector<16xf32>
    %98 = vector.multi_reduction <add>, %97, %cst_37 [1] : vector<16x128xf32> to vector<16xf32>
    %99 = vector.shape_cast %98 : vector<16xf32> to vector<16x1xf32>
    %100 = vector.extract_strided_slice %96 {offsets = [0, 0], sizes = [16, 128], strides = [1, 1]} : vector<16x256xf32> to vector<16x128xf32>
    %101 = vector.broadcast %99 : vector<16x1xf32> to vector<16x128xf32>
    %102 = arith.addf %101, %100 : vector<16x128xf32>
    %cst_38 = arith.constant 0.000000e+00 : f32
    %103 = vector.broadcast %cst_38 : f32 to vector<16x128xf32>
    %104 = arith.maximumf %102, %103 : vector<16x128xf32>
    %c0_39 = arith.constant 0 : index
    %c0_40 = arith.constant 0 : index
    %105 = vector.load %arg12[%c0_39, %c0_40] : memref<16x128xf32, #tpu.memory_space<vmem>>, vector<16x128xf32>
    tpu.vector_store %arg12[%c0_39, %c0_40], %104 {strides = array<i32>} : memref<16x128xf32, #tpu.memory_space<vmem>>, vector<16x128xf32>,
    %106 = vector.extract_strided_slice %96 {offsets = [0, 128], sizes = [16, 128], strides = [1, 1]} : vector<16x256xf32> to vector<16x128xf32>
    %107 = arith.addf %90, %106 : vector<16x128xf32>
    %c0_41 = arith.constant 0 : index
    %c0_42 = arith.constant 0 : index
    %108 = vector.load %arg11[%c0_41, %c0_42] : memref<16x128xf32, #tpu.memory_space<vmem>>, vector<16x128xf32>
    tpu.vector_store %arg11[%c0_41, %c0_42], %107 {strides = array<i32>} : memref<16x128xf32, #tpu.memory_space<vmem>>, vector<16x128xf32>,
    return
  }
  func.func @transform_0(%arg0: i32) -> (i32, i32) {
    %c0_i32 = arith.constant 0 : i32
    %c0_i32_0 = arith.constant 0 : i32
    return %arg0, %c0_i32 : i32, i32
  }
  func.func @transform_1(%arg0: i32) -> (i32, i32) {
    %c0_i32 = arith.constant 0 : i32
    %c0_i32_0 = arith.constant 0 : i32
    return %arg0, %c0_i32 : i32, i32
  }
  func.func @transform_2(%arg0: i32) -> (i32, i32) {
    %c0_i32 = arith.constant 0 : i32
    %c0_i32_0 = arith.constant 0 : i32
    %c0_i32_1 = arith.constant 0 : i32
    return %c0_i32, %c0_i32_0 : i32, i32
  }
  func.func @transform_3(%arg0: i32) -> (i32, i32) {
    %c0_i32 = arith.constant 0 : i32
    %c0_i32_0 = arith.constant 0 : i32
    %c0_i32_1 = arith.constant 0 : i32
    return %c0_i32, %c0_i32_0 : i32, i32
  }
  func.func @transform_4(%arg0: i32) -> (i32, i32) {
    %c0_i32 = arith.constant 0 : i32
    %c0_i32_0 = arith.constant 0 : i32
    %c0_i32_1 = arith.constant 0 : i32
    return %c0_i32, %c0_i32_0 : i32, i32
  }
  func.func @transform_5(%arg0: i32) -> (i32, i32) {
    %c0_i32 = arith.constant 0 : i32
    %c0_i32_0 = arith.constant 0 : i32
    %c0_i32_1 = arith.constant 0 : i32
    return %c0_i32, %c0_i32_0 : i32, i32
  }
  func.func @transform_6(%arg0: i32) -> (i32, i32) {
    %c0_i32 = arith.constant 0 : i32
    %c0_i32_0 = arith.constant 0 : i32
    %c0_i32_1 = arith.constant 0 : i32
    return %c0_i32, %c0_i32_0 : i32, i32
  }
  func.func @transform_7(%arg0: i32) -> (i32, i32) {
    %c0_i32 = arith.constant 0 : i32
    %c0_i32_0 = arith.constant 0 : i32
    %c0_i32_1 = arith.constant 0 : i32
    return %c0_i32, %c0_i32_0 : i32, i32
  }
  func.func @transform_8(%arg0: i32) -> (i32, i32) {
    %c0_i32 = arith.constant 0 : i32
    %c0_i32_0 = arith.constant 0 : i32
    %c0_i32_1 = arith.constant 0 : i32
    return %c0_i32, %c0_i32_0 : i32, i32
  }
  func.func @transform_9(%arg0: i32) -> (i32, i32) {
    %c0_i32 = arith.constant 0 : i32
    %c0_i32_0 = arith.constant 0 : i32
    %c0_i32_1 = arith.constant 0 : i32
    return %c0_i32, %c0_i32_0 : i32, i32
  }
  func.func @transform_10(%arg0: i32) -> (i32, i32) {
    %c0_i32 = arith.constant 0 : i32
    %c0_i32_0 = arith.constant 0 : i32
    return %arg0, %c0_i32 : i32, i32
  }
  func.func @transform_11(%arg0: i32) -> (i32, i32) {
    %c0_i32 = arith.constant 0 : i32
    %c0_i32_0 = arith.constant 0 : i32
    return %arg0, %c0_i32 : i32, i32
  }
}

</mosaic_0001>

<llo_original>
// kernel: tpu_custom_call.1
$region0: #{tpu_custom_call.1}
  #allocation0 [shape = 'u32[]', space=smem, size = 0x4, offset = 0x4, fixed_abs, tag = 'smem constant byte address 0x4 - core index']
  #allocation1 [shape = 'u32[72,128]{1,0:T(1,128)}', space=vmem, size = 0x9000, scoped, tag = 'internal scratch']
  %s0 = inlined_call_operand.vmem [shape: s32[16,8], index: 0, kind: input, shape index: {}]
  %s1 = inlined_call_operand.hbm [shape: bf16[16,48], index: 1, kind: input, shape index: {}]
  %s2 = inlined_call_operand.vmem [shape: bf16[176,32], index: 2, kind: input, shape index: {}]
  %s3 = inlined_call_operand.vmem [shape: f32[1,32], index: 3, kind: input, shape index: {}]
  %s4 = inlined_call_operand.vmem [shape: bf16[32,32], index: 4, kind: input, shape index: {}]
  %s5 = inlined_call_operand.vmem [shape: f32[1,32], index: 5, kind: input, shape index: {}]
  %s6 = inlined_call_operand.hbm [shape: bf16[32,128], index: 6, kind: input, shape index: {}]
  %s7 = inlined_call_operand.vmem [shape: f32[1,128], index: 7, kind: input, shape index: {}]
  %s8 = inlined_call_operand.vmem [shape: bf16[128,256], index: 8, kind: input, shape index: {}]
  %s9 = inlined_call_operand.vmem [shape: f32[1,256], index: 9, kind: input, shape index: {}]
  %s10 = inlined_call_operand.hbm [shape: f32[16,128], index: 10, kind: output, shape index: {0}]
  %s11 = inlined_call_operand.hbm [shape: f32[16,128], index: 11, kind: output, shape index: {1}]
  %12 = xla_tuple %s10, %s11
  %s13 = sld [smem:[#allocation0]]
  $region66: #{tpu_custom_call.1} parent=0
    _
  %s15 = ssub.s32 1, %s13
  %s16 = scalar_select 0, %s15, %s13
  $region1: #{tpu_custom_call.1} parent=0
    #allocation2 [shape = 'u8[4096]{0}', space=vmem, size = 0x1000, scoped, tag = 'input window, operand 1, single buffered']
    #allocation3 [shape = 's32[1]{0}', space=sflag, size = 0x4, scoped, tag = 'scoped memory for tpu_custom_call.1']
    #allocation4 [shape = 's32[1]{0}', space=sflag, size = 0x4, scoped, tag = 'scoped memory for tpu_custom_call.1']
    #allocation5 [shape = 'u8[8192]{0}', space=vmem, size = 0x2000, scoped, tag = 'input window, operand 6, single buffered']
    #allocation6 [shape = 's32[1]{0}', space=sflag, size = 0x4, scoped, tag = 'scoped memory for tpu_custom_call.1']
    #allocation7 [shape = 'u8[8192]{0}', space=vmem, size = 0x2000, scoped, tag = 'output window, operand 0, single buffered']
    #allocation8 [shape = 'u8[8192]{0}', space=vmem, size = 0x2000, scoped, tag = 'output window, operand 1, single buffered']
    #allocation9 [shape = 's32[1]{0}', space=sflag, size = 0x4, scoped, tag = 'scoped memory for tpu_custom_call.1']
    %17 = vsyncpa [#allocation3], 0
    %18 = vsyncpa [#allocation6], 0
    %19 = vsyncpa [#allocation4], 0
    %20 = vsyncpa [#allocation9], 0
    // Predicated region
    $region2: #{tpu_custom_call.1} parent=1 // pred_check
      _
    $region3: #{tpu_custom_call.1} parent=1 // pred_check_branch
      %22 = sbr.rel (0) target = $region5
    $region4: #{tpu_custom_call.1} parent=1 // pred_region
      _
    $region5: #{tpu_custom_call.1} parent=1 // pred_fallthru
      _
    // Predicated region
    $region6: #{tpu_custom_call.1} parent=1 // pred_check
      _
    $region7: #{tpu_custom_call.1} parent=1 // pred_check_branch
      %24 = sbr.rel (0) target = $region9
    $region8: #{tpu_custom_call.1} parent=1 // pred_region
      %26 = vsyncadd [#allocation3], 0
      %s27 = sshll.u32 %s1, 4
      %s28 = int_to_ptr.hbm [resolvable:$true] %s27
      %s29 = sshll.u32 [#allocation2], 4
      %s30 = int_to_ptr.vmem [resolvable:$true] %s29
      %35 = dma.hbm_to_vmem [thread:$0]  %s28, 128, %s30, [#allocation3], 64, 64, 4
    $region9: #{tpu_custom_call.1} parent=1 // pred_fallthru
      _
    // Predicated region
    $region10: #{tpu_custom_call.1} parent=1 // pred_check
      _
    $region11: #{tpu_custom_call.1} parent=1 // pred_check_branch
      %37 = sbr.rel (0) target = $region13
    $region12: #{tpu_custom_call.1} parent=1 // pred_region
      _
    $region13: #{tpu_custom_call.1} parent=1 // pred_fallthru
      _
    // Predicated region
    $region14: #{tpu_custom_call.1} parent=1 // pred_check
      _
    $region15: #{tpu_custom_call.1} parent=1 // pred_check_branch
      %39 = sbr.rel (0) target = $region17
    $region16: #{tpu_custom_call.1} parent=1 // pred_region
      _
    $region17: #{tpu_custom_call.1} parent=1 // pred_fallthru
      _
    // Predicated region
    $region18: #{tpu_custom_call.1} parent=1 // pred_check
      _
    $region19: #{tpu_custom_call.1} parent=1 // pred_check_branch
      %41 = sbr.rel (0) target = $region21
    $region20: #{tpu_custom_call.1} parent=1 // pred_region
      _
    $region21: #{tpu_custom_call.1} parent=1 // pred_fallthru
      _
    // Predicated region
    $region22: #{tpu_custom_call.1} parent=1 // pred_check
      _
    $region23: #{tpu_custom_call.1} parent=1 // pred_check_branch
      %43 = sbr.rel (0) target = $region25
    $region24: #{tpu_custom_call.1} parent=1 // pred_region
      _
    $region25: #{tpu_custom_call.1} parent=1 // pred_fallthru
      _
    // Predicated region
    $region26: #{tpu_custom_call.1} parent=1 // pred_check
      _
    $region27: #{tpu_custom_call.1} parent=1 // pred_check_branch
      %45 = sbr.rel (0) target = $region29
    $region28: #{tpu_custom_call.1} parent=1 // pred_region
      %47 = vsyncadd [#allocation6], 0
      %s48 = sshll.u32 %s6, 4
      %s49 = int_to_ptr.hbm [resolvable:$true] %s48
      %s50 = sshll.u32 [#allocation5], 4
      %s51 = int_to_ptr.vmem [resolvable:$true] %s50
      %56 = dma.hbm_to_vmem [thread:$0]  %s49, 256, %s51, [#allocation6], 64, 64, 4
    $region29: #{tpu_custom_call.1} parent=1 // pred_fallthru
      _
    // Predicated region
    $region30: #{tpu_custom_call.1} parent=1 // pred_check
      _
    $region31: #{tpu_custom_call.1} parent=1 // pred_check_branch
      %58 = sbr.rel (0) target = $region33
    $region32: #{tpu_custom_call.1} parent=1 // pred_region
      _
    $region33: #{tpu_custom_call.1} parent=1 // pred_fallthru
      _
    // Predicated region
    $region34: #{tpu_custom_call.1} parent=1 // pred_check
      _
    $region35: #{tpu_custom_call.1} parent=1 // pred_check_branch
      %60 = sbr.rel (0) target = $region37
    $region36: #{tpu_custom_call.1} parent=1 // pred_region
      _
    $region37: #{tpu_custom_call.1} parent=1 // pred_fallthru
      _
    // Predicated region
    $region38: #{tpu_custom_call.1} parent=1 // pred_check
      _
    $region39: #{tpu_custom_call.1} parent=1 // pred_check_branch
      %62 = sbr.rel (0) target = $region41
    $region40: #{tpu_custom_call.1} parent=1 // pred_region
      _
    $region41: #{tpu_custom_call.1} parent=1 // pred_fallthru
      _
    // Predicated region
    $region42: #{tpu_custom_call.1} parent=1 // pred_check
      _
    $region43: #{tpu_custom_call.1} parent=1 // pred_check_branch
      %64 = sbr.rel (0) target = $region45
    $region44: #{tpu_custom_call.1} parent=1 // pred_region
      %66 = dma.done [#allocation3], 128
    $region45: #{tpu_custom_call.1} parent=1 // pred_fallthru
      _
    // Predicated region
    $region46: #{tpu_custom_call.1} parent=1 // pred_check
      _
    $region47: #{tpu_custom_call.1} parent=1 // pred_check_branch
      %68 = sbr.rel (0) target = $region49
    $region48: #{tpu_custom_call.1} parent=1 // pred_region
      %70 = dma.done [#allocation6], 256
    $region49: #{tpu_custom_call.1} parent=1 // pred_fallthru
      _
    %v72 = vld [vmem:[%s0] sm:$0xff]
    %v73 = vld [vmem:[%s0 + $0x8] sm:$0xff]
    %vm74 = vcmp.eq.s32.totalorder %v72, 0
    %vm75 = vcmp.eq.s32.totalorder %v73, 0
    %vm76 = vcmp.ne.s32.totalorder %v72, 0
    %vm77 = vcmp.ne.s32.totalorder %v73, 0
    %v78 = vsel %vm76, 1, 0
    %v79 = vsel %vm77, 1, 0
    %v80 = vcvt.s32.f32 %v78
    %v81 = vcvt.s32.f32 %v79
    %v82 = vlaneseq
    %v83 = vand.u32 %v82, 127
    %84 = vrot.lane.b32.xlu0 %v72, 127
    %v85 = vpop.permute.xlu0 %84
    %86 = vrot.lane.b32.xlu0 %v73, 127
    %v87 = vpop.permute.xlu0 %86
    %v88 = vsel %vm74, 31, %v85
    %v89 = vsel %vm75, 31, %v87
    %90 = vset.pattern.permute.xlu0 0
    %91 = vperm.xlu0 %90, %v88
    %v92 = vpop.permute.xlu0 %91
    %93 = vset.pattern.permute.xlu0 0
    %94 = vperm.xlu0 %93, %v89
    %v95 = vpop.permute.xlu0 %94
    %vm96 = vcmp.eq.s32.totalorder %v83, %v92
    %vm97 = vcmp.eq.s32.totalorder %v83, %v95
    %98 = vrot.lane.b32.xlu0 %v72, 126
    %v99 = vpop.permute.xlu0 %98
    %100 = vrot.lane.b32.xlu0 %v73, 126
    %v101 = vpop.permute.xlu0 %100
    %v102 = vsel %vm74, 7, %v99
    %v103 = vsel %vm75, 7, %v101
    %v104 = vadd.s32 %v102, 32
    %v105 = vadd.s32 %v103, 32
    %106 = vset.pattern.permute.xlu0 0
    %107 = vperm.xlu0 %106, %v104
    %v108 = vpop.permute.xlu0 %107
    %109 = vset.pattern.permute.xlu0 0
    %110 = vperm.xlu0 %109, %v105
    %v111 = vpop.permute.xlu0 %110
    %vm112 = vcmp.eq.s32.totalorder %v83, %v108
    %vm113 = vcmp.eq.s32.totalorder %v83, %v111
    %vm114 = vmor %vm96, %vm112
    %vm115 = vmor %vm97, %vm113
    %116 = vrot.lane.b32.xlu0 %v72, 125
    %v117 = vpop.permute.xlu0 %116
    %118 = vrot.lane.b32.xlu0 %v73, 125
    %v119 = vpop.permute.xlu0 %118
    %v120 = vsel %vm74, 7, %v117
    %v121 = vsel %vm75, 7, %v119
    %v122 = vadd.s32 %v120, 40
    %v123 = vadd.s32 %v121, 40
    %124 = vset.pattern.permute.xlu0 0
    %125 = vperm.xlu0 %124, %v122
    %v126 = vpop.permute.xlu0 %125
    %127 = vset.pattern.permute.xlu0 0
    %128 = vperm.xlu0 %127, %v123
    %v129 = vpop.permute.xlu0 %128
    %vm130 = vcmp.eq.s32.totalorder %v83, %v126
    %vm131 = vcmp.eq.s32.totalorder %v83, %v129
    %vm132 = vmor %vm114, %vm130
    %vm133 = vmor %vm115, %vm131
    %v134 = vadd.s32 %v72, 48
    %v135 = vadd.s32 %v73, 48
    %136 = vset.pattern.permute.xlu0 4
    %137 = vperm.xlu0 %136, %v134
    %v138 = vpop.permute.xlu0 %137
    %139 = vset.pattern.permute.xlu0 4
    %140 = vperm.xlu0 %139, %v135
    %v141 = vpop.permute.xlu0 %140
    %vm142 = vcmp.eq.s32.totalorder %v83, %v138
    %vm143 = vcmp.eq.s32.totalorder %v83, %v141
    %vm144 = vmor %vm132, %vm142
    %vm145 = vmor %vm133, %vm143
    %v146 = vsel %vm144, 1, 0
    %v147 = vsel %vm145, 1, 0
    %v148 = vcvt.s32.f32 %v146
    %v149 = vcvt.s32.f32 %v147
    %v150 = vpack.c.bf16 %v148, %v148
    %v151 = vpack.c.bf16 %v149, %v149
    %v152 = vld [vmem:[#allocation2] sm:$0xf]
    %v153 = vld [vmem:[#allocation2 + $0x4] sm:$0xf]
    %v156 = vunpack.c.l.b16 %v150
    %v157 = vunpack.c.l.b16 %v151
    %v158 = vpack.c.b16 %v157, %v156
    %v162 = vunpack.c.l.b16 %v152
    %v163 = vunpack.c.l.b16 %v153
    %v164 = vpack.c.b16 %v163, %v162
    %v165 = vld [vmem:[%s2] sm:$0xf]
    %v166 = vld [vmem:[%s2 + $0x4] sm:$0xf]
    %v167 = vld [vmem:[%s2 + $0x8] sm:$0xf]
    %v168 = vld [vmem:[%s2 + $0xc] sm:$0xf]
    %v169 = vld [vmem:[%s2 + $0x10] sm:$0xf]
    %v170 = vld [vmem:[%s2 + $0x14] sm:$0xf]
    %v171 = vld [vmem:[%s2 + $0x18] sm:$0xf]
    %v172 = vld [vmem:[%s2 + $0x1c] sm:$0xf]
    %v173 = vld [vmem:[%s2 + $0x20] sm:$0xf]
    %v174 = vld [vmem:[%s2 + $0x24] sm:$0xf]
    %v175 = vld [vmem:[%s2 + $0x28] sm:$0xf]
    %v176 = vld [vmem:[%s2 + $0x2c] sm:$0xf]
    %v177 = vld [vmem:[%s2 + $0x30] sm:$0xf]
    %v178 = vld [vmem:[%s2 + $0x34] sm:$0xf]
    %v179 = vld [vmem:[%s2 + $0x38] sm:$0xf]
    %v180 = vld [vmem:[%s2 + $0x3c] sm:$0xf]
    %v181 = vld [vmem:[%s2 + $0x40] sm:$0xf]
    %v182 = vld [vmem:[%s2 + $0x44] sm:$0xf]
    %v183 = vld [vmem:[%s2 + $0x48] sm:$0xf]
    %v184 = vld [vmem:[%s2 + $0x4c] sm:$0xf]
    %v185 = vld [vmem:[%s2 + $0x50] sm:$0xf]
    %v186 = vld [vmem:[%s2 + $0x54] sm:$0xf]
    %v187 = vld [vmem:[%s3] sm:$0x1]
    %v189 = vperm.slane %v187, 0
    %v213 = vunpack.c.l.b16 %v165
    %v214 = vunpack.c.l.b16 %v166
    %v215 = vunpack.c.l.b16 %v167
    %v216 = vunpack.c.l.b16 %v168
    %v217 = vunpack.c.l.b16 %v169
    %v218 = vunpack.c.l.b16 %v170
    %v219 = vunpack.c.l.b16 %v171
    %v220 = vunpack.c.l.b16 %v172
    %v221 = vunpack.c.l.b16 %v173
    %v222 = vunpack.c.l.b16 %v174
    %v223 = vunpack.c.l.b16 %v175
    %v224 = vunpack.c.l.b16 %v176
    %v225 = vunpack.c.l.b16 %v177
    %v226 = vunpack.c.l.b16 %v178
    %v227 = vunpack.c.l.b16 %v179
    %v228 = vunpack.c.l.b16 %v180
    %v229 = vunpack.c.l.b16 %v181
    %v230 = vunpack.c.l.b16 %v182
    %v231 = vunpack.c.l.b16 %v183
    %v232 = vunpack.c.l.b16 %v184
    %v233 = vunpack.c.l.b16 %v185
    %v234 = vunpack.c.l.b16 %v186
    %v235 = vpack.c.b16 %v214, %v213
    %v236 = vpack.c.b16 %v216, %v215
    %v237 = vpack.c.b16 %v218, %v217
    %v238 = vpack.c.b16 %v220, %v219
    %v239 = vpack.c.b16 %v222, %v221
    %v240 = vpack.c.b16 %v224, %v223
    %v241 = vpack.c.b16 %v226, %v225
    %v242 = vpack.c.b16 %v228, %v227
    %v243 = vpack.c.b16 %v230, %v229
    %v244 = vpack.c.b16 %v232, %v231
    %v245 = vpack.c.b16 %v234, %v233
    %vm257 = vcmask 392192
    %v259 = vsel %vm257, %v164, 0
    %261 = vmatpush.bf16.msra.mxu0 %v242
    %262 = vmatpush.bf16.msra.mxu0 %v241
    %263 = vmatpush.bf16.msra.mxu0 %v240
    %264 = vmatpush.bf16.msra.mxu0 %v239
    %265 = vmatpush.bf16.msra.mxu0 %v238
    %266 = vmatpush.bf16.msra.mxu0 %v237
    %267 = vmatpush.bf16.msra.mxu0 %v236
    %268 = vmatpush.bf16.msra.mxu0 %v235
    %269 = vmatmul.bf16.gmra.mxu0 %v158
    %v270 = vpop.f32.mrf.mxu0
    %v271 = vadd.f32 %v189, %v270
    %v272 = vpop.f32.mrf.mxu0
    %v273 = vadd.f32 %v189, %v272
    %274 = vdwg.mxu0
    %275 = vmatpush.bf16.msra.mxu0 0
    %276 = vmatpush.bf16.msra.mxu0 0
    %277 = vmatpush.bf16.msra.mxu0 0
    %278 = vmatpush.bf16.msra.mxu0 0
    %279 = vmatpush.bf16.msra.mxu0 0
    %280 = vmatpush.bf16.msra.mxu0 %v245
    %281 = vmatpush.bf16.msra.mxu0 %v244
    %282 = vmatpush.bf16.msra.mxu0 %v243
    %283 = vmatmul.bf16.gmra.mxu0 %v259
    %v284 = vpop.f32.mrf.mxu0
    %v285 = vadd.f32 %v271, %v284
    %v286 = vpop.f32.mrf.mxu0
    %v287 = vadd.f32 %v273, %v286
    %288 = vdwg.mxu0
    %v289 = vmul.f32 %v285, %v285
    %v290 = vmul.f32 %v287, %v287
    %v291 = vmul.f32 %v285, %v289
    %v292 = vmul.f32 %v287, %v290
    %v293 = vmul.f32 %v291, 0.044715
    %v294 = vmul.f32 %v292, 0.044715
    %v295 = vadd.f32 %v285, %v293
    %v296 = vadd.f32 %v287, %v294
    %v297 = vmul.f32 %v295, 0.7978846
    %v298 = vmul.f32 %v296, 0.7978846
    %v299 = vtanh.pop %v297
    %v300 = vtanh.pop %v298
    %v301 = vadd.f32 %v299, 1.0
    %v302 = vadd.f32 %v300, 1.0
    %v303 = vmul.f32 %v301, 0.5
    %v304 = vmul.f32 %v302, 0.5
    %v305 = vmul.f32 %v285, %v303
    %v306 = vmul.f32 %v287, %v304
    %v307 = vpack.c.bf16 %v306, %v305
    %v308 = vld [vmem:[%s4] sm:$0xf]
    %v309 = vld [vmem:[%s4 + $0x4] sm:$0xf]
    %v310 = vld [vmem:[%s4 + $0x8] sm:$0xf]
    %v311 = vld [vmem:[%s4 + $0xc] sm:$0xf]
    %v312 = vld [vmem:[%s5] sm:$0x1]
    %v314 = vperm.slane %v312, 0
    %v320 = vunpack.c.l.b16 %v308
    %v321 = vunpack.c.l.b16 %v309
    %v322 = vunpack.c.l.b16 %v310
    %v323 = vunpack.c.l.b16 %v311
    %v324 = vpack.c.b16 %v321, %v320
    %v325 = vpack.c.b16 %v323, %v322
    %vm328 = vcmask 261120
    %v330 = vsel %vm328, %v307, 0
    %332 = vmatpush.bf16.msra.mxu0 0
    %333 = vmatpush.bf16.msra.mxu0 0
    %334 = vmatpush.bf16.msra.mxu0 0
    %335 = vmatpush.bf16.msra.mxu0 0
    %336 = vmatpush.bf16.msra.mxu0 0
    %337 = vmatpush.bf16.msra.mxu0 0
    %338 = vmatpush.bf16.msra.mxu0 %v325
    %339 = vmatpush.bf16.msra.mxu0 %v324
    %340 = vmatmul.bf16.gmra.mxu0 %v330
    %v341 = vpop.f32.mrf.mxu0
    %v342 = vadd.f32 %v314, %v341
    %v343 = vpop.f32.mrf.mxu0
    %v344 = vadd.f32 %v314, %v343
    %345 = vdwg.mxu0
    %v346 = vmul.f32 %v342, %v342
    %v347 = vmul.f32 %v344, %v344
    %v348 = vmul.f32 %v342, %v346
    %v349 = vmul.f32 %v344, %v347
    %v350 = vmul.f32 %v348, 0.044715
    %v351 = vmul.f32 %v349, 0.044715
    %v352 = vadd.f32 %v342, %v350
    %v353 = vadd.f32 %v344, %v351
    %v354 = vmul.f32 %v352, 0.7978846
    %v355 = vmul.f32 %v353, 0.7978846
    %v356 = vtanh.pop %v354
    %v357 = vtanh.pop %v355
    %v358 = vadd.f32 %v356, 1.0
    %v359 = vadd.f32 %v357, 1.0
    %v360 = vmul.f32 %v358, 0.5
    %v361 = vmul.f32 %v359, 0.5
    %v362 = vmul.f32 %v342, %v360
    %v363 = vmul.f32 %v344, %v361
    %v364 = vpack.c.bf16 %v363, %v362
    %v365 = vld [vmem:[#allocation5] sm:$0xf]
    %v366 = vld [vmem:[#allocation5 + $0x4] sm:$0xf]
    %v367 = vld [vmem:[#allocation5 + $0x8] sm:$0xf]
    %v368 = vld [vmem:[#allocation5 + $0xc] sm:$0xf]
    %v369 = vld [vmem:[%s7] sm:$0x1]
    %v371 = vperm.slane %v369, 0
    %v377 = vunpack.c.l.b16 %v365
    %v378 = vunpack.c.l.b16 %v366
    %v379 = vunpack.c.l.b16 %v367
    %v380 = vunpack.c.l.b16 %v368
    %v381 = vpack.c.b16 %v378, %v377
    %v382 = vpack.c.b16 %v380, %v379
    %v386 = vsel %vm328, %v364, 0
    %388 = vmatpush.bf16.msra.mxu0 0
    %389 = vmatpush.bf16.msra.mxu0 0
    %390 = vmatpush.bf16.msra.mxu0 0
    %391 = vmatpush.bf16.msra.mxu0 0
    %392 = vmatpush.bf16.msra.mxu0 0
    %393 = vmatpush.bf16.msra.mxu0 0
    %394 = vmatpush.bf16.msra.mxu0 %v382
    %395 = vmatpush.bf16.msra.mxu0 %v381
    %396 = vmatmul.bf16.gmra.mxu0 %v386
    %v397 = vpop.f32.mrf.mxu0
    %v398 = vadd.f32 %v371, %v397
    %v399 = vpop.f32.mrf.mxu0
    %v400 = vadd.f32 %v371, %v399
    %401 = vdwg.mxu0
    %403 = vset.pattern.permute.xlu0 0
    %404 = vperm.xlu0 %403, %v80
    %v405 = vpop.permute.xlu0 %404
    %408 = vset.pattern.permute.xlu0 0
    %409 = vperm.xlu0 %408, %v81
    %v410 = vpop.permute.xlu0 %409
    %v412 = vmul.f32 %v398, %v405
    %v413 = vmul.f32 %v400, %v410
    %v414 = vpack.c.bf16 %v413, %v412
    %v415 = vld [vmem:[%s8] sm:$0xff]
    %v416 = vld [vmem:[%s8 + $0x8] sm:$0xff]
    %v417 = vld [vmem:[%s8 + $0x10] sm:$0xff]
    %v418 = vld [vmem:[%s8 + $0x18] sm:$0xff]
    %v419 = vld [vmem:[%s8 + $0x20] sm:$0xff]
    %v420 = vld [vmem:[%s8 + $0x28] sm:$0xff]
    %v421 = vld [vmem:[%s8 + $0x30] sm:$0xff]
    %v422 = vld [vmem:[%s8 + $0x38] sm:$0xff]
    %v423 = vld [vmem:[%s8 + $0x40] sm:$0xff]
    %v424 = vld [vmem:[%s8 + $0x48] sm:$0xff]
    %v425 = vld [vmem:[%s8 + $0x50] sm:$0xff]
    %v426 = vld [vmem:[%s8 + $0x58] sm:$0xff]
    %v427 = vld [vmem:[%s8 + $0x60] sm:$0xff]
    %v428 = vld [vmem:[%s8 + $0x68] sm:$0xff]
    %v429 = vld [vmem:[%s8 + $0x70] sm:$0xff]
    %v430 = vld [vmem:[%s8 + $0x78] sm:$0xff]
    %v431 = vld [vmem:[%s9] sm:$0x3]
    %v433 = vperm.slane %v431, 0
    %v434 = vperm.slane %v431, 1
    %v453 = vunpack.c.l.b16 %v415
    %v454 = vunpack.c.h.b16 %v415
    %v455 = vunpack.c.l.b16 %v416
    %v456 = vunpack.c.h.b16 %v416
    %v457 = vunpack.c.l.b16 %v417
    %v458 = vunpack.c.h.b16 %v417
    %v459 = vunpack.c.l.b16 %v418
    %v460 = vunpack.c.h.b16 %v418
    %v461 = vunpack.c.l.b16 %v419
    %v462 = vunpack.c.h.b16 %v419
    %v463 = vunpack.c.l.b16 %v420
    %v464 = vunpack.c.h.b16 %v420
    %v465 = vunpack.c.l.b16 %v421
    %v466 = vunpack.c.h.b16 %v421
    %v467 = vunpack.c.l.b16 %v422
    %v468 = vunpack.c.h.b16 %v422
    %v469 = vunpack.c.l.b16 %v423
    %v470 = vunpack.c.h.b16 %v423
    %v471 = vunpack.c.l.b16 %v424
    %v472 = vunpack.c.h.b16 %v424
    %v473 = vunpack.c.l.b16 %v425
    %v474 = vunpack.c.h.b16 %v425
    %v475 = vunpack.c.l.b16 %v426
    %v476 = vunpack.c.h.b16 %v426
    %v477 = vunpack.c.l.b16 %v427
    %v478 = vunpack.c.h.b16 %v427
    %v479 = vunpack.c.l.b16 %v428
    %v480 = vunpack.c.h.b16 %v428
    %v481 = vunpack.c.l.b16 %v429
    %v482 = vunpack.c.h.b16 %v429
    %v483 = vunpack.c.l.b16 %v430
    %v484 = vunpack.c.h.b16 %v430
    %v485 = vpack.c.b16 %v455, %v453
    %v486 = vpack.c.b16 %v456, %v454
    %v487 = vpack.c.b16 %v459, %v457
    %v488 = vpack.c.b16 %v460, %v458
    %v489 = vpack.c.b16 %v463, %v461
    %v490 = vpack.c.b16 %v464, %v462
    %v491 = vpack.c.b16 %v467, %v465
    %v492 = vpack.c.b16 %v468, %v466
    %v493 = vpack.c.b16 %v471, %v469
    %v494 = vpack.c.b16 %v472, %v470
    %v495 = vpack.c.b16 %v475, %v473
    %v496 = vpack.c.b16 %v476, %v474
    %v497 = vpack.c.b16 %v479, %v477
    %v498 = vpack.c.b16 %v480, %v478
    %v499 = vpack.c.b16 %v483, %v481
    %v500 = vpack.c.b16 %v484, %v482
    %517 = vmatpush.bf16.msra.mxu0 %v499
    %518 = vmatpush.bf16.msra.mxu0 %v497
    %519 = vmatpush.bf16.msra.mxu0 %v495
    %520 = vmatpush.bf16.msra.mxu0 %v493
    %521 = vmatpush.bf16.msra.mxu0 %v491
    %522 = vmatpush.bf16.msra.mxu0 %v489
    %523 = vmatpush.bf16.msra.mxu0 %v487
    %524 = vmatpush.bf16.msra.mxu0 %v485
    %525 = vmatmul.bf16.gmra.mxu0 %v414
    %v526 = vpop.f32.mrf.mxu0
    %v527 = vadd.f32 %v433, %v526
    %v528 = vpop.f32.mrf.mxu0
    %v529 = vadd.f32 %v433, %v528
    %530 = vdwg.mxu0
    %531 = vmatpush.bf16.msra.mxu0 %v500
    %532 = vmatpush.bf16.msra.mxu0 %v498
    %533 = vmatpush.bf16.msra.mxu0 %v496
    %534 = vmatpush.bf16.msra.mxu0 %v494
    %535 = vmatpush.bf16.msra.mxu0 %v492
    %536 = vmatpush.bf16.msra.mxu0 %v490
    %537 = vmatpush.bf16.msra.mxu0 %v488
    %538 = vmatpush.bf16.msra.mxu0 %v486
    %539 = vmatmul.bf16.gmra.mxu0 %v414
    %v540 = vpop.f32.mrf.mxu0
    %v541 = vadd.f32 %v434, %v540
    %v542 = vpop.f32.mrf.mxu0
    %v543 = vadd.f32 %v434, %v542
    %544 = vdwg.mxu0
    %v545 = vmul.f32 %v412, %v412
    %v546 = vmul.f32 %v413, %v413
    %547 = vadd.xlane.f32.xlu0 %v545
    %v548 = vpop.xlane.xlu0 %547
    %549 = vadd.xlane.f32.xlu0 %v546
    %v550 = vpop.xlane.xlu0 %549
    %v551 = vadd.f32 %v548, %v527
    %v552 = vadd.f32 %v550, %v529
    %v553 = vmax.f32 %v551, 0.0
    %v554 = vmax.f32 %v552, 0.0
    %555 = vst [vmem:[#allocation8] sm:$0xff] %v553
    %556 = vst [vmem:[#allocation8 + $0x8] sm:$0xff] %v554
    %v557 = vadd.f32 %v412, %v541
    %v558 = vadd.f32 %v413, %v543
    %559 = vst [vmem:[#allocation7] sm:$0xff] %v557
    %560 = vst [vmem:[#allocation7 + $0x8] sm:$0xff] %v558
    // Predicated region
    $region50: #{tpu_custom_call.1} parent=1 // pred_check
      _
    $region51: #{tpu_custom_call.1} parent=1 // pred_check_branch
      %562 = sbr.rel (0) target = $region53
    $region52: #{tpu_custom_call.1} parent=1 // pred_region
      %564 = vsyncadd [#allocation4], 0
      %s565 = sshll.u32 [#allocation7], 4
      %s566 = int_to_ptr.vmem [resolvable:$true] %s565
      %s567 = sshll.u32 %s10, 4
      %s568 = int_to_ptr.hbm [resolvable:$true] %s567
      %573 = dma.vmem_to_hbm [thread:$0]  %s566, 256, %s568, [#allocation4], 128, 128, 8
    $region53: #{tpu_custom_call.1} parent=1 // pred_fallthru
      _
    // Predicated region
    $region54: #{tpu_custom_call.1} parent=1 // pred_check
      _
    $region55: #{tpu_custom_call.1} parent=1 // pred_check_branch
      %575 = sbr.rel (0) target = $region57
    $region56: #{tpu_custom_call.1} parent=1 // pred_region
      %577 = vsyncadd [#allocation9], 0
      %s578 = sshll.u32 [#allocation8], 4
      %s579 = int_to_ptr.vmem [resolvable:$true] %s578
      %s580 = sshll.u32 %s11, 4
      %s581 = int_to_ptr.hbm [resolvable:$true] %s580
      %586 = dma.vmem_to_hbm [thread:$0]  %s579, 256, %s581, [#allocation9], 128, 128, 8
    $region57: #{tpu_custom_call.1} parent=1 // pred_fallthru
      _
    // Predicated region
    $region58: #{tpu_custom_call.1} parent=1 // pred_check
      _
    $region59: #{tpu_custom_call.1} parent=1 // pred_check_branch
      %588 = sbr.rel (0) target = $region61
    $region60: #{tpu_custom_call.1} parent=1 // pred_region
      %590 = dma.done [#allocation4], 256
    $region61: #{tpu_custom_call.1} parent=1 // pred_fallthru
      _
    // Predicated region
    $region62: #{tpu_custom_call.1} parent=1 // pred_check
      _
    $region63: #{tpu_custom_call.1} parent=1 // pred_check_branch
      %592 = sbr.rel (0) target = $region65
    $region64: #{tpu_custom_call.1} parent=1 // pred_region
      %594 = dma.done [#allocation9], 256
    $region65: #{tpu_custom_call.1} parent=1 // pred_fallthru
      _
    %595 = vsyncpa [#allocation3], 1
    %596 = vsyncpa [#allocation6], 1
    %597 = vsyncpa [#allocation4], 1
    %598 = vsyncpa [#allocation9], 1

// kernel: tpu_custom_call.1
$region0: #{tpu_custom_call.1}
  #allocation0 [shape = 'u32[]', space=smem, size = 0x4, offset = 0x4, fixed_abs, tag = 'smem constant byte address 0x4 - core index']
  #allocation1 [shape = 'u32[72,128]{1,0:T(1,128)}', space=vmem, size = 0x9000, scoped, tag = 'internal scratch']
  %s0 = inlined_call_operand.vmem [shape: s32[16,8], index: 0, kind: input, shape index: {}]
  %s1 = inlined_call_operand.hbm [shape: bf16[16,48], index: 1, kind: input, shape index: {}]
  %s2 = inlined_call_operand.vmem [shape: bf16[176,32], index: 2, kind: input, shape index: {}]
  %s3 = inlined_call_operand.vmem [shape: f32[1,32], index: 3, kind: input, shape index: {}]
  %s4 = inlined_call_operand.vmem [shape: bf16[32,32], index: 4, kind: input, shape index: {}]
  %s5 = inlined_call_operand.vmem [shape: f32[1,32], index: 5, kind: input, shape index: {}]
  %s6 = inlined_call_operand.hbm [shape: bf16[32,128], index: 6, kind: input, shape index: {}]
  %s7 = inlined_call_operand.vmem [shape: f32[1,128], index: 7, kind: input, shape index: {}]
  %s8 = inlined_call_operand.vmem [shape: bf16[128,256], index: 8, kind: input, shape index: {}]
  %s9 = inlined_call_operand.vmem [shape: f32[1,256], index: 9, kind: input, shape index: {}]
  %s10 = inlined_call_operand.hbm [shape: f32[16,128], index: 10, kind: output, shape index: {0}]
  %s11 = inlined_call_operand.hbm [shape: f32[16,128], index: 11, kind: output, shape index: {1}]
  %12 = xla_tuple %s10, %s11
  %s13 = sld [smem:[#allocation0]]
  $region66: #{tpu_custom_call.1} parent=0
    _
  %s15 = ssub.s32 1, %s13
  %s16 = scalar_select 0, %s15, %s13
  $region1: #{tpu_custom_call.1} parent=0
    #allocation2 [shape = 'u8[4096]{0}', space=vmem, size = 0x1000, scoped, tag = 'input window, operand 1, single buffered']
    #allocation3 [shape = 's32[1]{0}', space=sflag, size = 0x4, scoped, tag = 'scoped memory for tpu_custom_call.1']
    #allocation4 [shape = 's32[1]{0}', space=sflag, size = 0x4, scoped, tag = 'scoped memory for tpu_custom_call.1']
    #allocation5 [shape = 'u8[8192]{0}', space=vmem, size = 0x2000, scoped, tag = 'input window, operand 6, single buffered']
    #allocation6 [shape = 's32[1]{0}', space=sflag, size = 0x4, scoped, tag = 'scoped memory for tpu_custom_call.1']
    #allocation7 [shape = 'u8[8192]{0}', space=vmem, size = 0x2000, scoped, tag = 'output window, operand 0, single buffered']
    #allocation8 [shape = 'u8[8192]{0}', space=vmem, size = 0x2000, scoped, tag = 'output window, operand 1, single buffered']
    #allocation9 [shape = 's32[1]{0}', space=sflag, size = 0x4, scoped, tag = 'scoped memory for tpu_custom_call.1']
    %17 = vsyncpa [#allocation3], 0
    %18 = vsyncpa [#allocation6], 0
    %19 = vsyncpa [#allocation4], 0
    %20 = vsyncpa [#allocation9], 0
    // Predicated region
    $region2: #{tpu_custom_call.1} parent=1 // pred_check
      _
    $region3: #{tpu_custom_call.1} parent=1 // pred_check_branch
      %22 = sbr.rel (0) target = $region5
    $region4: #{tpu_custom_call.1} parent=1 // pred_region
      _
    $region5: #{tpu_custom_call.1} parent=1 // pred_fallthru
      _
    // Predicated region
    $region6: #{tpu_custom_call.1} parent=1 // pred_check
      _
    $region7: #{tpu_custom_call.1} parent=1 // pred_check_branch
      %24 = sbr.rel (0) target = $region9
    $region8: #{tpu_custom_call.1} parent=1 // pred_region
      %26 = vsyncadd [#allocation3], 0
      %s27 = sshll.u32 %s1, 4
      %s28 = int_to_ptr.hbm [resolvable:$true] %s27
      %s29 = sshll.u32 [#allocation2], 4
      %s30 = int_to_ptr.vmem [resolvable:$true] %s29
      %35 = dma.hbm_to_vmem [thread:$0]  %s28, 128, %s30, [#allocation3], 64, 64, 4
    $region9: #{tpu_custom_call.1} parent=1 // pred_fallthru
      _
    // Predicated region
    $region10: #{tpu_custom_call.1} parent=1 // pred_check
      _
    $region11: #{tpu_custom_call.1} parent=1 // pred_check_branch
      %37 = sbr.rel (0) target = $region13
    $region12: #{tpu_custom_call.1} parent=1 // pred_region
      _
    $region13: #{tpu_custom_call.1} parent=1 // pred_fallthru
      _
    // Predicated region
    $region14: #{tpu_custom_call.1} parent=1 // pred_check
      _
    $region15: #{tpu_custom_call.1} parent=1 // pred_check_branch
      %39 = sbr.rel (0) target = $region17
    $region16: #{tpu_custom_call.1} parent=1 // pred_region
      _
    $region17: #{tpu_custom_call.1} parent=1 // pred_fallthru
      _
    // Predicated region
    $region18: #{tpu_custom_call.1} parent=1 // pred_check
      _
    $region19: #{tpu_custom_call.1} parent=1 // pred_check_branch
      %41 = sbr.rel (0) target = $region21
    $region20: #{tpu_custom_call.1} parent=1 // pred_region
      _
    $region21: #{tpu_custom_call.1} parent=1 // pred_fallthru
      _
    // Predicated region
    $region22: #{tpu_custom_call.1} parent=1 // pred_check
      _
    $region23: #{tpu_custom_call.1} parent=1 // pred_check_branch
      %43 = sbr.rel (0) target = $region25
    $region24: #{tpu_custom_call.1} parent=1 // pred_region
      _
    $region25: #{tpu_custom_call.1} parent=1 // pred_fallthru
      _
    // Predicated region
    $region26: #{tpu_custom_call.1} parent=1 // pred_check
      _
    $region27: #{tpu_custom_call.1} parent=1 // pred_check_branch
      %45 = sbr.rel (0) target = $region29
    $region28: #{tpu_custom_call.1} parent=1 // pred_region
      %47 = vsyncadd [#allocation6], 0
      %s48 = sshll.u32 %s6, 4
      %s49 = int_to_ptr.hbm [resolvable:$true] %s48
      %s50 = sshll.u32 [#allocation5], 4
      %s51 = int_to_ptr.vmem [resolvable:$true] %s50
      %56 = dma.hbm_to_vmem [thread:$0]  %s49, 256, %s51, [#allocation6], 64, 64, 4
    $region29: #{tpu_custom_call.1} parent=1 // pred_fallthru
      _
    // Predicated region
    $region30: #{tpu_custom_call.1} parent=1 // pred_check
      _
    $region31: #{tpu_custom_call.1} parent=1 // pred_check_branch
      %58 = sbr.rel (0) target = $region33
    $region32: #{tpu_custom_call.1} parent=1 // pred_region
      _
    $region33: #{tpu_custom_call.1} parent=1 // pred_fallthru
      _
    // Predicated region
    $region34: #{tpu_custom_call.1} parent=1 // pred_check
      _
    $region35: #{tpu_custom_call.1} parent=1 // pred_check_branch
      %60 = sbr.rel (0) target = $region37
    $region36: #{tpu_custom_call.1} parent=1 // pred_region
      _
    $region37: #{tpu_custom_call.1} parent=1 // pred_fallthru
      _
    // Predicated region
    $region38: #{tpu_custom_call.1} parent=1 // pred_check
      _
    $region39: #{tpu_custom_call.1} parent=1 // pred_check_branch
      %62 = sbr.rel (0) target = $region41
    $region40: #{tpu_custom_call.1} parent=1 // pred_region
      _
    $region41: #{tpu_custom_call.1} parent=1 // pred_fallthru
      _
    // Predicated region
    $region42: #{tpu_custom_call.1} parent=1 // pred_check
      _
    $region43: #{tpu_custom_call.1} parent=1 // pred_check_branch
      %64 = sbr.rel (0) target = $region45
    $region44: #{tpu_custom_call.1} parent=1 // pred_region
      %66 = dma.done [#allocation3], 128
    $region45: #{tpu_custom_call.1} parent=1 // pred_fallthru
      _
    // Predicated region
    $region46: #{tpu_custom_call.1} parent=1 // pred_check
      _
    $region47: #{tpu_custom_call.1} parent=1 // pred_check_branch
      %68 = sbr.rel (0) target = $region49
    $region48: #{tpu_custom_call.1} parent=1 // pred_region
      %70 = dma.done [#allocation6], 256
    $region49: #{tpu_custom_call.1} parent=1 // pred_fallthru
      _
    %v72 = vld [vmem:[%s0] sm:$0xff]
    %v73 = vld [vmem:[%s0 + $0x8] sm:$0xff]
    %vm74 = vcmp.eq.s32.totalorder %v72, 0
    %vm75 = vcmp.eq.s32.totalorder %v73, 0
    %vm76 = vcmp.ne.s32.totalorder %v72, 0
    %vm77 = vcmp.ne.s32.totalorder %v73, 0
    %v78 = vsel %vm76, 1, 0
    %v79 = vsel %vm77, 1, 0
    %v80 = vcvt.s32.f32 %v78
    %v81 = vcvt.s32.f32 %v79
    %v82 = vlaneseq
    %v83 = vand.u32 %v82, 127
    %84 = vrot.lane.b32.xlu0 %v72, 127
    %v85 = vpop.permute.xlu0 %84
    %86 = vrot.lane.b32.xlu0 %v73, 127
    %v87 = vpop.permute.xlu0 %86
    %v88 = vsel %vm74, 31, %v85
    %v89 = vsel %vm75, 31, %v87
    %90 = vset.pattern.permute.xlu0 0
    %91 = vperm.xlu0 %90, %v88
    %v92 = vpop.permute.xlu0 %91
    %93 = vset.pattern.permute.xlu0 0
    %94 = vperm.xlu0 %93, %v89
    %v95 = vpop.permute.xlu0 %94
    %vm96 = vcmp.eq.s32.totalorder %v83, %v92
    %vm97 = vcmp.eq.s32.totalorder %v83, %v95
    %98 = vrot.lane.b32.xlu0 %v72, 126
    %v99 = vpop.permute.xlu0 %98
    %100 = vrot.lane.b32.xlu0 %v73, 126
    %v101 = vpop.permute.xlu0 %100
    %v102 = vsel %vm74, 7, %v99
    %v103 = vsel %vm75, 7, %v101
    %v104 = vadd.s32 %v102, 32
    %v105 = vadd.s32 %v103, 32
    %106 = vset.pattern.permute.xlu0 0
    %107 = vperm.xlu0 %106, %v104
    %v108 = vpop.permute.xlu0 %107
    %109 = vset.pattern.permute.xlu0 0
    %110 = vperm.xlu0 %109, %v105
    %v111 = vpop.permute.xlu0 %110
    %vm112 = vcmp.eq.s32.totalorder %v83, %v108
    %vm113 = vcmp.eq.s32.totalorder %v83, %v111
    %vm114 = vmor %vm96, %vm112
    %vm115 = vmor %vm97, %vm113
    %116 = vrot.lane.b32.xlu0 %v72, 125
    %v117 = vpop.permute.xlu0 %116
    %118 = vrot.lane.b32.xlu0 %v73, 125
    %v119 = vpop.permute.xlu0 %118
    %v120 = vsel %vm74, 7, %v117
    %v121 = vsel %vm75, 7, %v119
    %v122 = vadd.s32 %v120, 40
    %v123 = vadd.s32 %v121, 40
    %124 = vset.pattern.permute.xlu0 0
    %125 = vperm.xlu0 %124, %v122
    %v126 = vpop.permute.xlu0 %125
    %127 = vset.pattern.permute.xlu0 0
    %128 = vperm.xlu0 %127, %v123
    %v129 = vpop.permute.xlu0 %128
    %vm130 = vcmp.eq.s32.totalorder %v83, %v126
    %vm131 = vcmp.eq.s32.totalorder %v83, %v129
    %vm132 = vmor %vm114, %vm130
    %vm133 = vmor %vm115, %vm131
    %v134 = vadd.s32 %v72, 48
    %v135 = vadd.s32 %v73, 48
    %136 = vset.pattern.permute.xlu0 4
    %137 = vperm.xlu0 %136, %v134
    %v138 = vpop.permute.xlu0 %137
    %139 = vset.pattern.permute.xlu0 4
    %140 = vperm.xlu0 %139, %v135
    %v141 = vpop.permute.xlu0 %140
    %vm142 = vcmp.eq.s32.totalorder %v83, %v138
    %vm143 = vcmp.eq.s32.totalorder %v83, %v141
    %vm144 = vmor %vm132, %vm142
    %vm145 = vmor %vm133, %vm143
    %v146 = vsel %vm144, 1, 0
    %v147 = vsel %vm145, 1, 0
    %v148 = vcvt.s32.f32 %v146
    %v149 = vcvt.s32.f32 %v147
    %v150 = vpack.c.bf16 %v148, %v148
    %v151 = vpack.c.bf16 %v149, %v149
    %v152 = vld [vmem:[#allocation2] sm:$0xf]
    %v153 = vld [vmem:[#allocation2 + $0x4] sm:$0xf]
    %v156 = vunpack.c.l.b16 %v150
    %v157 = vunpack.c.l.b16 %v151
    %v158 = vpack.c.b16 %v157, %v156
    %v162 = vunpack.c.l.b16 %v152
    %v163 = vunpack.c.l.b16 %v153
    %v164 = vpack.c.b16 %v163, %v162
    %v165 = vld [vmem:[%s2] sm:$0xf]
    %v166 = vld [vmem:[%s2 + $0x4] sm:$0xf]
    %v167 = vld [vmem:[%s2 + $0x8] sm:$0xf]
    %v168 = vld [vmem:[%s2 + $0xc] sm:$0xf]
    %v169 = vld [vmem:[%s2 + $0x10] sm:$0xf]
    %v170 = vld [vmem:[%s2 + $0x14] sm:$0xf]
    %v171 = vld [vmem:[%s2 + $0x18] sm:$0xf]
    %v172 = vld [vmem:[%s2 + $0x1c] sm:$0xf]
    %v173 = vld [vmem:[%s2 + $0x20] sm:$0xf]
    %v174 = vld [vmem:[%s2 + $0x24] sm:$0xf]
    %v175 = vld [vmem:[%s2 + $0x28] sm:$0xf]
    %v176 = vld [vmem:[%s2 + $0x2c] sm:$0xf]
    %v177 = vld [vmem:[%s2 + $0x30] sm:$0xf]
    %v178 = vld [vmem:[%s2 + $0x34] sm:$0xf]
    %v179 = vld [vmem:[%s2 + $0x38] sm:$0xf]
    %v180 = vld [vmem:[%s2 + $0x3c] sm:$0xf]
    %v181 = vld [vmem:[%s2 + $0x40] sm:$0xf]
    %v182 = vld [vmem:[%s2 + $0x44] sm:$0xf]
    %v183 = vld [vmem:[%s2 + $0x48] sm:$0xf]
    %v184 = vld [vmem:[%s2 + $0x4c] sm:$0xf]
    %v185 = vld [vmem:[%s2 + $0x50] sm:$0xf]
    %v186 = vld [vmem:[%s2 + $0x54] sm:$0xf]
    %v187 = vld [vmem:[%s3] sm:$0x1]
    %v189 = vperm.slane %v187, 0
    %v213 = vunpack.c.l.b16 %v165
    %v214 = vunpack.c.l.b16 %v166
    %v215 = vunpack.c.l.b16 %v167
    %v216 = vunpack.c.l.b16 %v168
    %v217 = vunpack.c.l.b16 %v169
    %v218 = vunpack.c.l.b16 %v170
    %v219 = vunpack.c.l.b16 %v171
    %v220 = vunpack.c.l.b16 %v172
    %v221 = vunpack.c.l.b16 %v173
    %v222 = vunpack.c.l.b16 %v174
    %v223 = vunpack.c.l.b16 %v175
    %v224 = vunpack.c.l.b16 %v176
    %v225 = vunpack.c.l.b16 %v177
    %v226 = vunpack.c.l.b16 %v178
    %v227 = vunpack.c.l.b16 %v179
    %v228 = vunpack.c.l.b16 %v180
    %v229 = vunpack.c.l.b16 %v181
    %v230 = vunpack.c.l.b16 %v182
    %v231 = vunpack.c.l.b16 %v183
    %v232 = vunpack.c.l.b16 %v184
    %v233 = vunpack.c.l.b16 %v185
    %v234 = vunpack.c.l.b16 %v186
    %v235 = vpack.c.b16 %v214, %v213
    %v236 = vpack.c.b16 %v216, %v215
    %v237 = vpack.c.b16 %v218, %v217
    %v238 = vpack.c.b16 %v220, %v219
    %v239 = vpack.c.b16 %v222, %v221
    %v240 = vpack.c.b16 %v224, %v223
    %v241 = vpack.c.b16 %v226, %v225
    %v242 = vpack.c.b16 %v228, %v227
    %v243 = vpack.c.b16 %v230, %v229
    %v244 = vpack.c.b16 %v232, %v231
    %v245 = vpack.c.b16 %v234, %v233
    %vm257 = vcmask 392192
    %v259 = vsel %vm257, %v164, 0
    %261 = vmatpush.bf16.msra.mxu0 %v242
    %262 = vmatpush.bf16.msra.mxu0 %v241
    %263 = vmatpush.bf16.msra.mxu0 %v240
    %264 = vmatpush.bf16.msra.mxu0 %v239
    %265 = vmatpush.bf16.msra.mxu0 %v238
    %266 = vmatpush.bf16.msra.mxu0 %v237
    %267 = vmatpush.bf16.msra.mxu0 %v236
    %268 = vmatpush.bf16.msra.mxu0 %v235
    %269 = vmatmul.bf16.gmra.mxu0 %v158
    %v270 = vpop.f32.mrf.mxu0
    %v271 = vadd.f32 %v189, %v270
    %v272 = vpop.f32.mrf.mxu0
    %v273 = vadd.f32 %v189, %v272
    %274 = vdwg.mxu0
    %275 = vmatpush.bf16.msra.mxu0 0
    %276 = vmatpush.bf16.msra.mxu0 0
    %277 = vmatpush.bf16.msra.mxu0 0
    %278 = vmatpush.bf16.msra.mxu0 0
    %279 = vmatpush.bf16.msra.mxu0 0
    %280 = vmatpush.bf16.msra.mxu0 %v245
    %281 = vmatpush.bf16.msra.mxu0 %v244
    %282 = vmatpush.bf16.msra.mxu0 %v243
    %283 = vmatmul.bf16.gmra.mxu0 %v259
    %v284 = vpop.f32.mrf.mxu0
    %v285 = vadd.f32 %v271, %v284
    %v286 = vpop.f32.mrf.mxu0
    %v287 = vadd.f32 %v273, %v286
    %288 = vdwg.mxu0
    %v289 = vmul.f32 %v285, %v285
    %v290 = vmul.f32 %v287, %v287
    %v291 = vmul.f32 %v285, %v289
    %v292 = vmul.f32 %v287, %v290
    %v293 = vmul.f32 %v291, 0.044715
    %v294 = vmul.f32 %v292, 0.044715
    %v295 = vadd.f32 %v285, %v293
    %v296 = vadd.f32 %v287, %v294
    %v297 = vmul.f32 %v295, 0.7978846
    %v298 = vmul.f32 %v296, 0.7978846
    %v299 = vtanh.pop %v297
    %v300 = vtanh.pop %v298
    %v301 = vadd.f32 %v299, 1.0
    %v302 = vadd.f32 %v300, 1.0
    %v303 = vmul.f32 %v301, 0.5
    %v304 = vmul.f32 %v302, 0.5
    %v305 = vmul.f32 %v285, %v303
    %v306 = vmul.f32 %v287, %v304
    %v307 = vpack.c.bf16 %v306, %v305
    %v308 = vld [vmem:[%s4] sm:$0xf]
    %v309 = vld [vmem:[%s4 + $0x4] sm:$0xf]
    %v310 = vld [vmem:[%s4 + $0x8] sm:$0xf]
    %v311 = vld [vmem:[%s4 + $0xc] sm:$0xf]
    %v312 = vld [vmem:[%s5] sm:$0x1]
    %v314 = vperm.slane %v312, 0
    %v320 = vunpack.c.l.b16 %v308
    %v321 = vunpack.c.l.b16 %v309
    %v322 = vunpack.c.l.b16 %v310
    %v323 = vunpack.c.l.b16 %v311
    %v324 = vpack.c.b16 %v321, %v320
    %v325 = vpack.c.b16 %v323, %v322
    %vm328 = vcmask 261120
    %v330 = vsel %vm328, %v307, 0
    %332 = vmatpush.bf16.msra.mxu0 0
    %333 = vmatpush.bf16.msra.mxu0 0
    %334 = vmatpush.bf16.msra.mxu0 0
    %335 = vmatpush.bf16.msra.mxu0 0
    %336 = vmatpush.bf16.msra.mxu0 0
    %337 = vmatpush.bf16.msra.mxu0 0
    %338 = vmatpush.bf16.msra.mxu0 %v325
    %339 = vmatpush.bf16.msra.mxu0 %v324
    %340 = vmatmul.bf16.gmra.mxu0 %v330
    %v341 = vpop.f32.mrf.mxu0
    %v342 = vadd.f32 %v314, %v341
    %v343 = vpop.f32.mrf.mxu0
    %v344 = vadd.f32 %v314, %v343
    %345 = vdwg.mxu0
    %v346 = vmul.f32 %v342, %v342
    %v347 = vmul.f32 %v344, %v344
    %v348 = vmul.f32 %v342, %v346
    %v349 = vmul.f32 %v344, %v347
    %v350 = vmul.f32 %v348, 0.044715
    %v351 = vmul.f32 %v349, 0.044715
    %v352 = vadd.f32 %v342, %v350
    %v353 = vadd.f32 %v344, %v351
    %v354 = vmul.f32 %v352, 0.7978846
    %v355 = vmul.f32 %v353, 0.7978846
    %v356 = vtanh.pop %v354
    %v357 = vtanh.pop %v355
    %v358 = vadd.f32 %v356, 1.0
    %v359 = vadd.f32 %v357, 1.0
    %v360 = vmul.f32 %v358, 0.5
    %v361 = vmul.f32 %v359, 0.5
    %v362 = vmul.f32 %v342, %v360
    %v363 = vmul.f32 %v344, %v361
    %v364 = vpack.c.bf16 %v363, %v362
    %v365 = vld [vmem:[#allocation5] sm:$0xf]
    %v366 = vld [vmem:[#allocation5 + $0x4] sm:$0xf]
    %v367 = vld [vmem:[#allocation5 + $0x8] sm:$0xf]
    %v368 = vld [vmem:[#allocation5 + $0xc] sm:$0xf]
    %v369 = vld [vmem:[%s7] sm:$0x1]
    %v371 = vperm.slane %v369, 0
    %v377 = vunpack.c.l.b16 %v365
    %v378 = vunpack.c.l.b16 %v366
    %v379 = vunpack.c.l.b16 %v367
    %v380 = vunpack.c.l.b16 %v368
    %v381 = vpack.c.b16 %v378, %v377
    %v382 = vpack.c.b16 %v380, %v379
    %v386 = vsel %vm328, %v364, 0
    %388 = vmatpush.bf16.msra.mxu0 0
    %389 = vmatpush.bf16.msra.mxu0 0
    %390 = vmatpush.bf16.msra.mxu0 0
    %391 = vmatpush.bf16.msra.mxu0 0
    %392 = vmatpush.bf16.msra.mxu0 0
    %393 = vmatpush.bf16.msra.mxu0 0
    %394 = vmatpush.bf16.msra.mxu0 %v382
    %395 = vmatpush.bf16.msra.mxu0 %v381
    %396 = vmatmul.bf16.gmra.mxu0 %v386
    %v397 = vpop.f32.mrf.mxu0
    %v398 = vadd.f32 %v371, %v397
    %v399 = vpop.f32.mrf.mxu0
    %v400 = vadd.f32 %v371, %v399
    %401 = vdwg.mxu0
    %403 = vset.pattern.permute.xlu0 0
    %404 = vperm.xlu0 %403, %v80
    %v405 = vpop.permute.xlu0 %404
    %408 = vset.pattern.permute.xlu0 0
    %409 = vperm.xlu0 %408, %v81
    %v410 = vpop.permute.xlu0 %409
    %v412 = vmul.f32 %v398, %v405
    %v413 = vmul.f32 %v400, %v410
    %v414 = vpack.c.bf16 %v413, %v412
    %v415 = vld [vmem:[%s8] sm:$0xff]
    %v416 = vld [vmem:[%s8 + $0x8] sm:$0xff]
    %v417 = vld [vmem:[%s8 + $0x10] sm:$0xff]
    %v418 = vld [vmem:[%s8 + $0x18] sm:$0xff]
    %v419 = vld [vmem:[%s8 + $0x20] sm:$0xff]
    %v420 = vld [vmem:[%s8 + $0x28] sm:$0xff]
    %v421 = vld [vmem:[%s8 + $0x30] sm:$0xff]
    %v422 = vld [vmem:[%s8 + $0x38] sm:$0xff]
    %v423 = vld [vmem:[%s8 + $0x40] sm:$0xff]
    %v424 = vld [vmem:[%s8 + $0x48] sm:$0xff]
    %v425 = vld [vmem:[%s8 + $0x50] sm:$0xff]
    %v426 = vld [vmem:[%s8 + $0x58] sm:$0xff]
    %v427 = vld [vmem:[%s8 + $0x60] sm:$0xff]
    %v428 = vld [vmem:[%s8 + $0x68] sm:$0xff]
    %v429 = vld [vmem:[%s8 + $0x70] sm:$0xff]
    %v430 = vld [vmem:[%s8 + $0x78] sm:$0xff]
    %v431 = vld [vmem:[%s9] sm:$0x3]
    %v433 = vperm.slane %v431, 0
    %v434 = vperm.slane %v431, 1
    %v453 = vunpack.c.l.b16 %v415
    %v454 = vunpack.c.h.b16 %v415
    %v455 = vunpack.c.l.b16 %v416
    %v456 = vunpack.c.h.b16 %v416
    %v457 = vunpack.c.l.b16 %v417
    %v458 = vunpack.c.h.b16 %v417
    %v459 = vunpack.c.l.b16 %v418
    %v460 = vunpack.c.h.b16 %v418
    %v461 = vunpack.c.l.b16 %v419
    %v462 = vunpack.c.h.b16 %v419
    %v463 = vunpack.c.l.b16 %v420
    %v464 = vunpack.c.h.b16 %v420
    %v465 = vunpack.c.l.b16 %v421
    %v466 = vunpack.c.h.b16 %v421
    %v467 = vunpack.c.l.b16 %v422
    %v468 = vunpack.c.h.b16 %v422
    %v469 = vunpack.c.l.b16 %v423
    %v470 = vunpack.c.h.b16 %v423
    %v471 = vunpack.c.l.b16 %v424
    %v472 = vunpack.c.h.b16 %v424
    %v473 = vunpack.c.l.b16 %v425
    %v474 = vunpack.c.h.b16 %v425
    %v475 = vunpack.c.l.b16 %v426
    %v476 = vunpack.c.h.b16 %v426
    %v477 = vunpack.c.l.b16 %v427
    %v478 = vunpack.c.h.b16 %v427
    %v479 = vunpack.c.l.b16 %v428
    %v480 = vunpack.c.h.b16 %v428
    %v481 = vunpack.c.l.b16 %v429
    %v482 = vunpack.c.h.b16 %v429
    %v483 = vunpack.c.l.b16 %v430
    %v484 = vunpack.c.h.b16 %v430
    %v485 = vpack.c.b16 %v455, %v453
    %v486 = vpack.c.b16 %v456, %v454
    %v487 = vpack.c.b16 %v459, %v457
    %v488 = vpack.c.b16 %v460, %v458
    %v489 = vpack.c.b16 %v463, %v461
    %v490 = vpack.c.b16 %v464, %v462
    %v491 = vpack.c.b16 %v467, %v465
    %v492 = vpack.c.b16 %v468, %v466
    %v493 = vpack.c.b16 %v471, %v469
    %v494 = vpack.c.b16 %v472, %v470
    %v495 = vpack.c.b16 %v475, %v473
    %v496 = vpack.c.b16 %v476, %v474
    %v497 = vpack.c.b16 %v479, %v477
    %v498 = vpack.c.b16 %v480, %v478
    %v499 = vpack.c.b16 %v483, %v481
    %v500 = vpack.c.b16 %v484, %v482
    %517 = vmatpush.bf16.msra.mxu0 %v499
    %518 = vmatpush.bf16.msra.mxu0 %v497
    %519 = vmatpush.bf16.msra.mxu0 %v495
    %520 = vmatpush.bf16.msra.mxu0 %v493
    %521 = vmatpush.bf16.msra.mxu0 %v491
    %522 = vmatpush.bf16.msra.mxu0 %v489
    %523 = vmatpush.bf16.msra.mxu0 %v487
    %524 = vmatpush.bf16.msra.mxu0 %v485
    %525 = vmatmul.bf16.gmra.mxu0 %v414
    %v526 = vpop.f32.mrf.mxu0
    %v527 = vadd.f32 %v433, %v526
    %v528 = vpop.f32.mrf.mxu0
    %v529 = vadd.f32 %v433, %v528
    %530 = vdwg.mxu0
    %531 = vmatpush.bf16.msra.mxu0 %v500
    %532 = vmatpush.bf16.msra.mxu0 %v498
    %533 = vmatpush.bf16.msra.mxu0 %v496
    %534 = vmatpush.bf16.msra.mxu0 %v494
    %535 = vmatpush.bf16.msra.mxu0 %v492
    %536 = vmatpush.bf16.msra.mxu0 %v490
    %537 = vmatpush.bf16.msra.mxu0 %v488
    %538 = vmatpush.bf16.msra.mxu0 %v486
    %539 = vmatmul.bf16.gmra.mxu0 %v414
    %v540 = vpop.f32.mrf.mxu0
    %v541 = vadd.f32 %v434, %v540
    %v542 = vpop.f32.mrf.mxu0
    %v543 = vadd.f32 %v434, %v542
    %544 = vdwg.mxu0
    %v545 = vmul.f32 %v412, %v412
    %v546 = vmul.f32 %v413, %v413
    %547 = vadd.xlane.f32.xlu0 %v545
    %v548 = vpop.xlane.xlu0 %547
    %549 = vadd.xlane.f32.xlu0 %v546
    %v550 = vpop.xlane.xlu0 %549
    %v551 = vadd.f32 %v548, %v527
    %v552 = vadd.f32 %v550, %v529
    %v553 = vmax.f32 %v551, 0.0
    %v554 = vmax.f32 %v552, 0.0
    %555 = vst [vmem:[#allocation8] sm:$0xff] %v553
    %556 = vst [vmem:[#allocation8 + $0x8] sm:$0xff] %v554
    %v557 = vadd.f32 %v412, %v541
    %v558 = vadd.f32 %v413, %v543
    %559 = vst [vmem:[#allocation7] sm:$0xff] %v557
    %560 = vst [vmem:[#allocation7 + $0x8] sm:$0xff] %v558
    // Predicated region
    $region50: #{tpu_custom_call.1} parent=1 // pred_check
      _
    $region51: #{tpu_custom_call.1} parent=1 // pred_check_branch
      %562 = sbr.rel (0) target = $region53
    $region52: #{tpu_custom_call.1} parent=1 // pred_region
      %564 = vsyncadd [#allocation4], 0
      %s565 = sshll.u32 [#allocation7], 4
      %s566 = int_to_ptr.vmem [resolvable:$true] %s565
      %s567 = sshll.u32 %s10, 4
      %s568 = int_to_ptr.hbm [resolvable:$true] %s567
      %573 = dma.vmem_to_hbm [thread:$0]  %s566, 256, %s568, [#allocation4], 128, 128, 8
    $region53: #{tpu_custom_call.1} parent=1 // pred_fallthru
      _
    // Predicated region
    $region54: #{tpu_custom_call.1} parent=1 // pred_check
      _
    $region55: #{tpu_custom_call.1} parent=1 // pred_check_branch
      %575 = sbr.rel (0) target = $region57
    $region56: #{tpu_custom_call.1} parent=1 // pred_region
      %577 = vsyncadd [#allocation9], 0
      %s578 = sshll.u32 [#allocation8], 4
      %s579 = int_to_ptr.vmem [resolvable:$true] %s578
      %s580 = sshll.u32 %s11, 4
      %s581 = int_to_ptr.hbm [resolvable:$true] %s580
      %586 = dma.vmem_to_hbm [thread:$0]  %s579, 256, %s581, [#allocation9], 128, 128, 8
    $region57: #{tpu_custom_call.1} parent=1 // pred_fallthru
      _
    // Predicated region
    $region58: #{tpu_custom_call.1} parent=1 // pred_check
      _
    $region59: #{tpu_custom_call.1} parent=1 // pred_check_branch
      %588 = sbr.rel (0) target = $region61
    $region60: #{tpu_custom_call.1} parent=1 // pred_region
      %590 = dma.done [#allocation4], 256
    $region61: #{tpu_custom_call.1} parent=1 // pred_fallthru
      _
    // Predicated region
    $region62: #{tpu_custom_call.1} parent=1 // pred_check
      _
    $region63: #{tpu_custom_call.1} parent=1 // pred_check_branch
      %592 = sbr.rel (0) target = $region65
    $region64: #{tpu_custom_call.1} parent=1 // pred_region
      %594 = dma.done [#allocation9], 256
    $region65: #{tpu_custom_call.1} parent=1 // pred_fallthru
      _
    %595 = vsyncpa [#allocation3], 1
    %596 = vsyncpa [#allocation6], 1
    %597 = vsyncpa [#allocation4], 1
    %598 = vsyncpa [#allocation9], 1

</llo_original>
